<compile_context>
chip_gen: v7x
topology: tpu7x:2x2x1
jax: 0.10.0
libtpu: 0.0.40
codegen_flags: <defaults>
</compile_context>

<pallas_src>
import math
from functools import partial

import jax
import jax.numpy as jnp
from jax.experimental import pallas as pl
from jax.experimental.pallas import tpu as pltpu

OUT_LANES = 128          # lane-dense FC output width (>= num_classes)


# ----------------------------------------------------------------------------------
# Kernel
# ----------------------------------------------------------------------------------
def blstm_kernel(ids_ref,       # SMEM (T*Bp,) int32   token ids, row index = t*Bp + b
                 emb_ref,       # VMEM (Vp, E) f32     embedding table (rows padded to 8)
                 slab_ref,      # VMEM (E+8+2H, 8H) f32   packed params (see pack_params)
                 out_ref,       # VMEM (Bp, OUT_LANES) f32
                 emb_sc,        # VMEM scratch (T*Bp, E) f32
                 gx_ref,        # VMEM scratch (T*Bp, 8H) f32
                 *, T, Bp, E, H, out_lanes):
    TB = T * Bp
    H4 = 4 * H

    # ---- 1) embedding gather via SMEM ids: per-row dynamic loads, no one-hot ----
    def gather_row(r, carry):
        tok = ids_ref[r]                                   # scalar from SMEM
        emb_sc[pl.ds(r, 1), :] = emb_ref[pl.ds(tok, 1), :]
        return carry
    jax.lax.fori_loop(0, TB, gather_row, 0)

    # ---- 2) hoisted input projections (both directions) + folded biases -> VMEM ----
    wcat = slab_ref[0:E, :]                                # (E, 8H)
    bcat = slab_ref[E:E + 1, :]                            # (1, 8H)
    gx_ref[...] = (jnp.dot(emb_sc[...], wcat, preferred_element_type=jnp.float32)
                   + bcat)                                 # (T*Bp, 8H), staged in VMEM

    # ---- static, tile-aligned views of the packed parameter slab ----
    r0 = E + 8
    whh_f = slab_ref[r0:r0 + H, 0:H4]                      # (H, 4H)  g-cols pre-doubled
    fcw_f = slab_ref[r0:r0 + H, H4:H4 + out_lanes]         # (H, 128)
    fcw_b = slab_ref[r0 + H:r0 + 2 * H, 0:out_lanes]       # (H, 128)
    fcb   = slab_ref[r0 + H:r0 + H + 1, H4:H4 + out_lanes] # (1, 128)

    def activations(gates):
        # one full-width sigmoid EUP push; tanh(g) recovered on the VPU because the
        # g-block pre-activation was pre-scaled by 2 at pack time.
        sg = jax.nn.sigmoid(gates)
        i = sg[:, 0 * H:1 * H]
        f = sg[:, 1 * H:2 * H]
        g = 2.0 * sg[:, 2 * H:3 * H] - 1.0                 # == tanh(x_g)
        o = sg[:, 3 * H:4 * H]
        return i, f, g, o

    # ---- 3) forward recurrence: per-step slice load + h @ whh_f on the serial path ----
    def step(t, hc):
        h, c = hc
        row = pl.multiple_of(t * Bp, Bp)
        gx = gx_ref[pl.ds(row, Bp), 0:H4]                  # (Bp, 4H), 1 vreg at Bp=8
        gates = gx + jnp.dot(h, whh_f, preferred_element_type=jnp.float32)
        i, f, g, o = activations(gates)
        c = f * c + i * g
        h = o * jnp.tanh(c)                                # width-H EUP push
        return (h, c)

    z = jnp.zeros((Bp, H), jnp.float32)
    h_fwd, _ = jax.lax.fori_loop(0, T, step, (z, z), unroll=True)
    # h_fwd == lstm_out[:, -1, :H]

    # ---- 4) backward direction at t = T-1: one cell, zero initial state ----
    gb = gx_ref[pl.ds((T - 1) * Bp, Bp), H4:2 * H4]
    ib, fb, gg, ob = activations(gb)
    cb = ib * gg                                           # fb * c0 == 0
    h_bwd = ob * jnp.tanh(cb)                              # == lstm_out[:, -1, H:]

    # ---- 5) FC without a lane concat: two dots + add; lane-dense unmasked store ----
    out_ref[...] = (jnp.dot(h_fwd, fcw_f, preferred_element_type=jnp.float32)
                    + jnp.dot(h_bwd, fcw_b, preferred_element_type=jnp.float32)
                    + fcb)


# ----------------------------------------------------------------------------------
# Parameter construction (PyTorch layout) and packing into kernel layout
# ----------------------------------------------------------------------------------
def init_params(key, vocab_size=500, embedding_dim=64, hidden_size=32, num_classes=2):
    ks = jax.random.split(key, 11)
    H, E, C = hidden_size, embedding_dim, num_classes
    bound = 1.0 / math.sqrt(H)

    emb_table = 0.1 * jax.random.normal(ks[0], (vocab_size, E), jnp.float32)
    emb_table = emb_table.at[0].set(0.0)                   # padding_idx=0

    def u(k, shape):
        return jax.random.uniform(k, shape, jnp.float32, minval=-bound, maxval=bound)

    # PyTorch nn.LSTM shapes: weight_ih (4H, E), weight_hh (4H, H), biases (4H,)
    w_ih_f, w_hh_f = u(ks[1], (4 * H, E)), u(ks[2], (4 * H, H))
    b_ih_f, b_hh_f = u(ks[3], (4 * H,)), u(ks[4], (4 * H,))
    w_ih_b, w_hh_b = u(ks[5], (4 * H, E)), u(ks[6], (4 * H, H))
    b_ih_b, b_hh_b = u(ks[7], (4 * H,)), u(ks[8], (4 * H,))

    fc_bound = 1.0 / math.sqrt(2 * H)
    fc_w = jax.random.uniform(ks[9], (C, 2 * H), jnp.float32, minval=-fc_bound, maxval=fc_bound)
    fc_b = jax.random.uniform(ks[10], (C,), jnp.float32, minval=-fc_bound, maxval=fc_bound)

    return dict(emb_table=emb_table,
                w_ih_f=w_ih_f, w_hh_f=w_hh_f, b_ih_f=b_ih_f, b_hh_f=b_hh_f,
                w_ih_b=w_ih_b, w_hh_b=w_hh_b, b_ih_b=b_ih_b, b_hh_b=b_hh_b,
                fc_w=fc_w, fc_b=fc_b)


def pack_params(p, out_lanes=OUT_LANES):
    """One-time repacking of PyTorch-layout params into the kernel layout.

    Produces:
      emb_pad : (Vp, E)          vocab rows padded to a multiple of 8
      slab    : (E+8+2H, 8H)     [ wcat ; bias row ; [whh_f | fcw_f] ; [fcw_b | fcb] ]
    with the "g"-gate columns of wcat / whh_f / biases pre-scaled by 2 so the kernel
    can compute tanh(x_g) as 2*sigmoid(2*x_g)-1 from a single full-width sigmoid.
    """
    H = p["w_hh_f"].shape[1]
    E = p["w_ih_f"].shape[1]
    C = p["fc_w"].shape[0]
    V = p["emb_table"].shape[0]
    assert C <= out_lanes
    assert out_lanes <= 4 * H, "slab layout assumes FC lane pad fits beside whh_f"

    Vp = ((V + 7) // 8) * 8
    emb_pad = jnp.zeros((Vp, E), jnp.float32).at[:V].set(p["emb_table"])

    g_scale = jnp.ones((4 * H,), jnp.float32).at[2 * H:3 * H].set(2.0)

    def fold_dir(w_ih, w_hh, b_ih, b_hh):
        w_it = w_ih.T * g_scale                            # (E, 4H)
        w_ht = w_hh.T * g_scale                            # (H, 4H)
        b = (b_ih + b_hh) * g_scale                        # (4H,)
        return w_it, w_ht, b

    wi_f, wh_f, b_f = fold_dir(p["w_ih_f"], p["w_hh_f"], p["b_ih_f"], p["b_hh_f"])
    wi_b, _,    b_b = fold_dir(p["w_ih_b"], p["w_hh_b"], p["b_ih_b"], p["b_hh_b"])
    # w_hh_b is not needed: the backward hidden at t = T-1 uses a zero initial state.

    wcat = jnp.concatenate([wi_f, wi_b], axis=1)           # (E, 8H)
    bcat = jnp.concatenate([b_f, b_b])                     # (8H,)

    fc_wt = p["fc_w"].T                                    # (2H, C)
    fcw_f = jnp.zeros((H, out_lanes), jnp.float32).at[:, :C].set(fc_wt[:H])
    fcw_b = jnp.zeros((H, out_lanes), jnp.float32).at[:, :C].set(fc_wt[H:])
    fcb = jnp.zeros((out_lanes,), jnp.float32).at[:C].set(p["fc_b"])

    rows = E + 8 + 2 * H                                   # all sections 8-row aligned
    slab = jnp.zeros((rows, 8 * H), jnp.float32)
    slab = slab.at[0:E, :].set(wcat)
    slab = slab.at[E, :].set(bcat)
    r0 = E + 8
    slab = slab.at[r0:r0 + H, 0:4 * H].set(wh_f)
    slab = slab.at[r0:r0 + H, 4 * H:4 * H + out_lanes].set(fcw_f)
    slab = slab.at[r0 + H:r0 + 2 * H, 0:out_lanes].set(fcw_b)
    slab = slab.at[r0 + H, 4 * H:4 * H + out_lanes].set(fcb)

    return dict(emb_pad=emb_pad, slab=slab)


# ----------------------------------------------------------------------------------
# Forward wrapper
# ----------------------------------------------------------------------------------
@partial(jax.jit, static_argnames=("num_classes",))
def blstm_forward(input_seq, kparams, num_classes=2):
    B, T = input_seq.shape
    Bp = max(8, ((B + 7) // 8) * 8)                        # full sublanes
    E = kparams["emb_pad"].shape[1]
    H = kparams["slab"].shape[1] // 8

    ids = jnp.pad(input_seq.astype(jnp.int32), ((0, Bp - B), (0, 0)))  # pad rows -> token 0
    ids_tb = ids.T.reshape(T * Bp)                         # row index = t*Bp + b

    kernel = partial(blstm_kernel, T=T, Bp=Bp, E=E, H=H, out_lanes=OUT_LANES)
    out = pl.pallas_call(
        kernel,
        out_shape=jax.ShapeDtypeStruct((Bp, OUT_LANES), jnp.float32),
        in_specs=[pl.BlockSpec(memory_space=pltpu.MemorySpace.SMEM),   # ids
                  pl.BlockSpec(memory_space=pltpu.MemorySpace.VMEM),   # embedding table
                  pl.BlockSpec(memory_space=pltpu.MemorySpace.VMEM)],  # packed param slab
        out_specs=pl.BlockSpec(memory_space=pltpu.MemorySpace.VMEM),
        scratch_shapes=[pltpu.VMEM((T * Bp, E), jnp.float32),          # gathered embeddings
                        pltpu.VMEM((T * Bp, 8 * H), jnp.float32)],     # staged gates_x
    )(ids_tb, kparams["emb_pad"], kparams["slab"])

    return out[:B, :num_classes]


# ----------------------------------------------------------------------------------
# Pure-JAX reference with full PyTorch bidirectional-LSTM semantics (all timesteps,
# both directions, including w_hh_b) -- validates the backward-pass collapse and the
# pre-doubled-g / tanh-via-sigmoid rewrite.
# ----------------------------------------------------------------------------------
def blstm_reference(input_seq, params):
    embeds = params["emb_table"][input_seq]                # (B, T, E)
    B, T, _ = embeds.shape
    H = params["w_hh_f"].shape[1]
    hi = jax.lax.Precision.HIGHEST

    def cell(x_t, h, c, w_ih, w_hh, b_ih, b_hh):
        g = (jnp.dot(x_t, w_ih.T, precision=hi)
             + jnp.dot(h, w_hh.T, precision=hi) + b_ih + b_hh)
        i = jax.nn.sigmoid(g[:, :H]); f = jax.nn.sigmoid(g[:, H:2 * H])
        gg = jnp.tanh(g[:, 2 * H:3 * H]); o = jax.nn.sigmoid(g[:, 3 * H:])
        c = f * c + i * gg
        return o * jnp.tanh(c), c

    h = c = jnp.zeros((B, H), jnp.float32)
    fwd = []
    for t in range(T):
        h, c = cell(embeds[:, t], h, c, params["w_ih_f"], params["w_hh_f"],
                    params["b_ih_f"], params["b_hh_f"])
        fwd.append(h)

    hb = cb = jnp.zeros((B, H), jnp.float32)
    bwd = [None] * T
    for t in range(T - 1, -1, -1):
        hb, cb = cell(embeds[:, t], hb, cb, params["w_ih_b"], params["w_hh_b"],
                      params["b_ih_b"], params["b_hh_b"])
        bwd[t] = hb

    lstm_out = jnp.concatenate([jnp.stack(fwd, 1), jnp.stack(bwd, 1)], axis=-1)
    final = lstm_out[:, -1]                                # (B, 2H)
    return jnp.dot(final, params["fc_w"].T, precision=hi) + params["fc_b"]


if __name__ == "__main__":
    key = jax.random.PRNGKey(0)
    k_in, k_params = jax.random.split(key)

    B, T = 2, 8
    vocab_size, embedding_dim, hidden_size, num_classes = 500, 64, 32, 2

    input_seq = jax.random.randint(k_in, (B, T), 0, vocab_size, dtype=jnp.int32)
    params = init_params(k_params, vocab_size, embedding_dim, hidden_size, num_classes)
    kparams = pack_params(params)

    out = blstm_forward(input_seq, kparams, num_classes=num_classes)
    out = jax.block_until_ready(out)

    ref = blstm_reference(input_seq, params)
    assert out.shape == (B, num_classes)
    assert jnp.allclose(out, ref, atol=1e-4, rtol=1e-4), (out, ref)

    print("KERNEL_OK")
</pallas_src>

<mosaic_0001>
module attributes {stable_mosaic.version = 11 : i64} {
  func.func @blstm_kernel(%arg0: memref<64xi32, #tpu.memory_space<smem>>, %arg1: memref<504x64xf32, #tpu.memory_space<vmem>>, %arg2: memref<136x256xf32, #tpu.memory_space<vmem>>, %arg3: memref<8x128xf32, #tpu.memory_space<vmem>>, %arg4: memref<64x64xf32, #tpu.memory_space<vmem>>, %arg5: memref<64x256xf32, #tpu.memory_space<vmem>>) attributes {dimension_semantics = [], scalar_prefetch = 0 : i64, scratch_operands = 2 : i64, tpu.core_type = #tpu.core_type<tc>} {
    %c0_i32 = arith.constant 0 : i32
    %c64_i32 = arith.constant 64 : i32
    %0 = arith.addi %c0_i32, %c64_i32 : i32
    %c1_i32 = arith.constant 1 : i32
    scf.for %arg6 = %c0_i32 to %0 step %c1_i32  : i32 {
      %227 = arith.index_cast %arg6 : i32 to index
      %228 = memref.load %arg0[%227] : memref<64xi32, #tpu.memory_space<smem>>
      %229 = arith.index_cast %228 : i32 to index
      %c0_71 = arith.constant 0 : index
      %230 = vector.load %arg1[%229, %c0_71] : memref<504x64xf32, #tpu.memory_space<vmem>>, vector<1x64xf32>
      %231 = arith.index_cast %arg6 : i32 to index
      %c0_72 = arith.constant 0 : index
      %232 = vector.load %arg4[%231, %c0_72] : memref<64x64xf32, #tpu.memory_space<vmem>>, vector<1x64xf32>
      tpu.vector_store %arg4[%231, %c0_72], %230 {strides = array<i32>} : memref<64x64xf32, #tpu.memory_space<vmem>>, vector<1x64xf32>,
    }
    %c64_i32_0 = arith.constant 64 : i32
    %c0 = arith.constant 0 : index
    %c0_1 = arith.constant 0 : index
    %1 = vector.load %arg2[%c0, %c0_1] : memref<136x256xf32, #tpu.memory_space<vmem>>, vector<64x256xf32>
    %c64 = arith.constant 64 : index
    %c0_2 = arith.constant 0 : index
    %2 = vector.load %arg2[%c64, %c0_2] : memref<136x256xf32, #tpu.memory_space<vmem>>, vector<1x256xf32>
    %c0_3 = arith.constant 0 : index
    %c0_4 = arith.constant 0 : index
    %3 = vector.load %arg4[%c0_3, %c0_4] : memref<64x64xf32, #tpu.memory_space<vmem>>, vector<64x64xf32>
    %cst = arith.constant dense<0.000000e+00> : vector<64x256xf32>
    %4 = tpu.matmul %3, %1, %cst {dimension_numbers = #tpu.dot_dimension_numbers<[1], [0], [0], [1], [0, 0, 1, 1], [], []>} : vector<64x64xf32>, vector<64x256xf32>, vector<64x256xf32> -> vector<64x256xf32>
    %5 = vector.broadcast %2 : vector<1x256xf32> to vector<64x256xf32>
    %6 = arith.addf %4, %5 : vector<64x256xf32>
    %c0_5 = arith.constant 0 : index
    %c0_6 = arith.constant 0 : index
    %7 = vector.load %arg5[%c0_5, %c0_6] : memref<64x256xf32, #tpu.memory_space<vmem>>, vector<64x256xf32>
    tpu.vector_store %arg5[%c0_5, %c0_6], %6 {strides = array<i32>} : memref<64x256xf32, #tpu.memory_space<vmem>>, vector<64x256xf32>,
    %c72 = arith.constant 72 : index
    %c0_7 = arith.constant 0 : index
    %8 = vector.load %arg2[%c72, %c0_7] : memref<136x256xf32, #tpu.memory_space<vmem>>, vector<32x128xf32>
    %c72_8 = arith.constant 72 : index
    %c128 = arith.constant 128 : index
    %9 = vector.load %arg2[%c72_8, %c128] : memref<136x256xf32, #tpu.memory_space<vmem>>, vector<32x128xf32>
    %c104 = arith.constant 104 : index
    %c0_9 = arith.constant 0 : index
    %10 = vector.load %arg2[%c104, %c0_9] : memref<136x256xf32, #tpu.memory_space<vmem>>, vector<32x128xf32>
    %c104_10 = arith.constant 104 : index
    %c128_11 = arith.constant 128 : index
    %11 = vector.load %arg2[%c104_10, %c128_11] : memref<136x256xf32, #tpu.memory_space<vmem>>, vector<1x128xf32>
    %cst_12 = arith.constant 0.000000e+00 : f32
    %12 = vector.broadcast %cst_12 : f32 to vector<8x32xf32>
    %c0_i32_13 = arith.constant 0 : i32
    %c8_i32 = arith.constant 8 : i32
    %13 = arith.muli %c0_i32_13, %c8_i32 : i32
    %14 = tpu.assume_multiple %13, 8 : i32
    %15 = arith.index_cast %14 : i32 to index
    %c0_14 = arith.constant 0 : index
    %16 = vector.load %arg5[%15, %c0_14] : memref<64x256xf32, #tpu.memory_space<vmem>>, vector<8x128xf32>
    %cst_15 = arith.constant dense<0.000000e+00> : vector<8x128xf32>
    %17 = tpu.matmul %12, %8, %cst_15 {dimension_numbers = #tpu.dot_dimension_numbers<[1], [0], [0], [1], [0, 0, 1, 1], [], []>} : vector<8x32xf32>, vector<32x128xf32>, vector<8x128xf32> -> vector<8x128xf32>
    %18 = arith.addf %16, %17 : vector<8x128xf32>
    %19 = arith.negf %18 : vector<8x128xf32>
    %20 = math.exp %19 : vector<8x128xf32>
    %cst_16 = arith.constant 1.000000e+00 : f32
    %21 = vector.broadcast %cst_16 : f32 to vector<8x128xf32>
    %22 = arith.addf %21, %20 : vector<8x128xf32>
    %23 = arith.divf %21, %22 : vector<8x128xf32>
    %24 = vector.extract_strided_slice %23 {offsets = [0, 0], sizes = [8, 32], strides = [1, 1]} : vector<8x128xf32> to vector<8x32xf32>
    %25 = vector.extract_strided_slice %23 {offsets = [0, 32], sizes = [8, 32], strides = [1, 1]} : vector<8x128xf32> to vector<8x32xf32>
    %26 = vector.extract_strided_slice %23 {offsets = [0, 64], sizes = [8, 32], strides = [1, 1]} : vector<8x128xf32> to vector<8x32xf32>
    %cst_17 = arith.constant 2.000000e+00 : f32
    %27 = vector.broadcast %cst_17 : f32 to vector<8x32xf32>
    %28 = arith.mulf %27, %26 : vector<8x32xf32>
    %cst_18 = arith.constant 1.000000e+00 : f32
    %29 = vector.broadcast %cst_18 : f32 to vector<8x32xf32>
    %30 = arith.subf %28, %29 : vector<8x32xf32>
    %31 = vector.extract_strided_slice %23 {offsets = [0, 96], sizes = [8, 32], strides = [1, 1]} : vector<8x128xf32> to vector<8x32xf32>
    %32 = arith.mulf %25, %12 : vector<8x32xf32>
    %33 = arith.mulf %24, %30 : vector<8x32xf32>
    %34 = arith.addf %32, %33 : vector<8x32xf32>
    %35 = math.tanh %34 : vector<8x32xf32>
    %36 = arith.mulf %31, %35 : vector<8x32xf32>
    %c1_i32_19 = arith.constant 1 : i32
    %c8_i32_20 = arith.constant 8 : i32
    %37 = arith.muli %c1_i32_19, %c8_i32_20 : i32
    %38 = tpu.assume_multiple %37, 8 : i32
    %39 = arith.index_cast %38 : i32 to index
    %c0_21 = arith.constant 0 : index
    %40 = vector.load %arg5[%39, %c0_21] : memref<64x256xf32, #tpu.memory_space<vmem>>, vector<8x128xf32>
    %cst_22 = arith.constant dense<0.000000e+00> : vector<8x128xf32>
    %41 = tpu.matmul %36, %8, %cst_22 {dimension_numbers = #tpu.dot_dimension_numbers<[1], [0], [0], [1], [0, 0, 1, 1], [], []>} : vector<8x32xf32>, vector<32x128xf32>, vector<8x128xf32> -> vector<8x128xf32>
    %42 = arith.addf %40, %41 : vector<8x128xf32>
    %43 = arith.negf %42 : vector<8x128xf32>
    %44 = math.exp %43 : vector<8x128xf32>
    %cst_23 = arith.constant 1.000000e+00 : f32
    %45 = vector.broadcast %cst_23 : f32 to vector<8x128xf32>
    %46 = arith.addf %45, %44 : vector<8x128xf32>
    %47 = arith.divf %45, %46 : vector<8x128xf32>
    %48 = vector.extract_strided_slice %47 {offsets = [0, 0], sizes = [8, 32], strides = [1, 1]} : vector<8x128xf32> to vector<8x32xf32>
    %49 = vector.extract_strided_slice %47 {offsets = [0, 32], sizes = [8, 32], strides = [1, 1]} : vector<8x128xf32> to vector<8x32xf32>
    %50 = vector.extract_strided_slice %47 {offsets = [0, 64], sizes = [8, 32], strides = [1, 1]} : vector<8x128xf32> to vector<8x32xf32>
    %cst_24 = arith.constant 2.000000e+00 : f32
    %51 = vector.broadcast %cst_24 : f32 to vector<8x32xf32>
    %52 = arith.mulf %51, %50 : vector<8x32xf32>
    %cst_25 = arith.constant 1.000000e+00 : f32
    %53 = vector.broadcast %cst_25 : f32 to vector<8x32xf32>
    %54 = arith.subf %52, %53 : vector<8x32xf32>
    %55 = vector.extract_strided_slice %47 {offsets = [0, 96], sizes = [8, 32], strides = [1, 1]} : vector<8x128xf32> to vector<8x32xf32>
    %56 = arith.mulf %49, %34 : vector<8x32xf32>
    %57 = arith.mulf %48, %54 : vector<8x32xf32>
    %58 = arith.addf %56, %57 : vector<8x32xf32>
    %59 = math.tanh %58 : vector<8x32xf32>
    %60 = arith.mulf %55, %59 : vector<8x32xf32>
    %c2_i32 = arith.constant 2 : i32
    %c8_i32_26 = arith.constant 8 : i32
    %61 = arith.muli %c2_i32, %c8_i32_26 : i32
    %62 = tpu.assume_multiple %61, 8 : i32
    %63 = arith.index_cast %62 : i32 to index
    %c0_27 = arith.constant 0 : index
    %64 = vector.load %arg5[%63, %c0_27] : memref<64x256xf32, #tpu.memory_space<vmem>>, vector<8x128xf32>
    %cst_28 = arith.constant dense<0.000000e+00> : vector<8x128xf32>
    %65 = tpu.matmul %60, %8, %cst_28 {dimension_numbers = #tpu.dot_dimension_numbers<[1], [0], [0], [1], [0, 0, 1, 1], [], []>} : vector<8x32xf32>, vector<32x128xf32>, vector<8x128xf32> -> vector<8x128xf32>
    %66 = arith.addf %64, %65 : vector<8x128xf32>
    %67 = arith.negf %66 : vector<8x128xf32>
    %68 = math.exp %67 : vector<8x128xf32>
    %cst_29 = arith.constant 1.000000e+00 : f32
    %69 = vector.broadcast %cst_29 : f32 to vector<8x128xf32>
    %70 = arith.addf %69, %68 : vector<8x128xf32>
    %71 = arith.divf %69, %70 : vector<8x128xf32>
    %72 = vector.extract_strided_slice %71 {offsets = [0, 0], sizes = [8, 32], strides = [1, 1]} : vector<8x128xf32> to vector<8x32xf32>
    %73 = vector.extract_strided_slice %71 {offsets = [0, 32], sizes = [8, 32], strides = [1, 1]} : vector<8x128xf32> to vector<8x32xf32>
    %74 = vector.extract_strided_slice %71 {offsets = [0, 64], sizes = [8, 32], strides = [1, 1]} : vector<8x128xf32> to vector<8x32xf32>
    %cst_30 = arith.constant 2.000000e+00 : f32
    %75 = vector.broadcast %cst_30 : f32 to vector<8x32xf32>
    %76 = arith.mulf %75, %74 : vector<8x32xf32>
    %cst_31 = arith.constant 1.000000e+00 : f32
    %77 = vector.broadcast %cst_31 : f32 to vector<8x32xf32>
    %78 = arith.subf %76, %77 : vector<8x32xf32>
    %79 = vector.extract_strided_slice %71 {offsets = [0, 96], sizes = [8, 32], strides = [1, 1]} : vector<8x128xf32> to vector<8x32xf32>
    %80 = arith.mulf %73, %58 : vector<8x32xf32>
    %81 = arith.mulf %72, %78 : vector<8x32xf32>
    %82 = arith.addf %80, %81 : vector<8x32xf32>
    %83 = math.tanh %82 : vector<8x32xf32>
    %84 = arith.mulf %79, %83 : vector<8x32xf32>
    %c3_i32 = arith.constant 3 : i32
    %c8_i32_32 = arith.constant 8 : i32
    %85 = arith.muli %c3_i32, %c8_i32_32 : i32
    %86 = tpu.assume_multiple %85, 8 : i32
    %87 = arith.index_cast %86 : i32 to index
    %c0_33 = arith.constant 0 : index
    %88 = vector.load %arg5[%87, %c0_33] : memref<64x256xf32, #tpu.memory_space<vmem>>, vector<8x128xf32>
    %cst_34 = arith.constant dense<0.000000e+00> : vector<8x128xf32>
    %89 = tpu.matmul %84, %8, %cst_34 {dimension_numbers = #tpu.dot_dimension_numbers<[1], [0], [0], [1], [0, 0, 1, 1], [], []>} : vector<8x32xf32>, vector<32x128xf32>, vector<8x128xf32> -> vector<8x128xf32>
    %90 = arith.addf %88, %89 : vector<8x128xf32>
    %91 = arith.negf %90 : vector<8x128xf32>
    %92 = math.exp %91 : vector<8x128xf32>
    %cst_35 = arith.constant 1.000000e+00 : f32
    %93 = vector.broadcast %cst_35 : f32 to vector<8x128xf32>
    %94 = arith.addf %93, %92 : vector<8x128xf32>
    %95 = arith.divf %93, %94 : vector<8x128xf32>
    %96 = vector.extract_strided_slice %95 {offsets = [0, 0], sizes = [8, 32], strides = [1, 1]} : vector<8x128xf32> to vector<8x32xf32>
    %97 = vector.extract_strided_slice %95 {offsets = [0, 32], sizes = [8, 32], strides = [1, 1]} : vector<8x128xf32> to vector<8x32xf32>
    %98 = vector.extract_strided_slice %95 {offsets = [0, 64], sizes = [8, 32], strides = [1, 1]} : vector<8x128xf32> to vector<8x32xf32>
    %cst_36 = arith.constant 2.000000e+00 : f32
    %99 = vector.broadcast %cst_36 : f32 to vector<8x32xf32>
    %100 = arith.mulf %99, %98 : vector<8x32xf32>
    %cst_37 = arith.constant 1.000000e+00 : f32
    %101 = vector.broadcast %cst_37 : f32 to vector<8x32xf32>
    %102 = arith.subf %100, %101 : vector<8x32xf32>
    %103 = vector.extract_strided_slice %95 {offsets = [0, 96], sizes = [8, 32], strides = [1, 1]} : vector<8x128xf32> to vector<8x32xf32>
    %104 = arith.mulf %97, %82 : vector<8x32xf32>
    %105 = arith.mulf %96, %102 : vector<8x32xf32>
    %106 = arith.addf %104, %105 : vector<8x32xf32>
    %107 = math.tanh %106 : vector<8x32xf32>
    %108 = arith.mulf %103, %107 : vector<8x32xf32>
    %c4_i32 = arith.constant 4 : i32
    %c8_i32_38 = arith.constant 8 : i32
    %109 = arith.muli %c4_i32, %c8_i32_38 : i32
    %110 = tpu.assume_multiple %109, 8 : i32
    %111 = arith.index_cast %110 : i32 to index
    %c0_39 = arith.constant 0 : index
    %112 = vector.load %arg5[%111, %c0_39] : memref<64x256xf32, #tpu.memory_space<vmem>>, vector<8x128xf32>
    %cst_40 = arith.constant dense<0.000000e+00> : vector<8x128xf32>
    %113 = tpu.matmul %108, %8, %cst_40 {dimension_numbers = #tpu.dot_dimension_numbers<[1], [0], [0], [1], [0, 0, 1, 1], [], []>} : vector<8x32xf32>, vector<32x128xf32>, vector<8x128xf32> -> vector<8x128xf32>
    %114 = arith.addf %112, %113 : vector<8x128xf32>
    %115 = arith.negf %114 : vector<8x128xf32>
    %116 = math.exp %115 : vector<8x128xf32>
    %cst_41 = arith.constant 1.000000e+00 : f32
    %117 = vector.broadcast %cst_41 : f32 to vector<8x128xf32>
    %118 = arith.addf %117, %116 : vector<8x128xf32>
    %119 = arith.divf %117, %118 : vector<8x128xf32>
    %120 = vector.extract_strided_slice %119 {offsets = [0, 0], sizes = [8, 32], strides = [1, 1]} : vector<8x128xf32> to vector<8x32xf32>
    %121 = vector.extract_strided_slice %119 {offsets = [0, 32], sizes = [8, 32], strides = [1, 1]} : vector<8x128xf32> to vector<8x32xf32>
    %122 = vector.extract_strided_slice %119 {offsets = [0, 64], sizes = [8, 32], strides = [1, 1]} : vector<8x128xf32> to vector<8x32xf32>
    %cst_42 = arith.constant 2.000000e+00 : f32
    %123 = vector.broadcast %cst_42 : f32 to vector<8x32xf32>
    %124 = arith.mulf %123, %122 : vector<8x32xf32>
    %cst_43 = arith.constant 1.000000e+00 : f32
    %125 = vector.broadcast %cst_43 : f32 to vector<8x32xf32>
    %126 = arith.subf %124, %125 : vector<8x32xf32>
    %127 = vector.extract_strided_slice %119 {offsets = [0, 96], sizes = [8, 32], strides = [1, 1]} : vector<8x128xf32> to vector<8x32xf32>
    %128 = arith.mulf %121, %106 : vector<8x32xf32>
    %129 = arith.mulf %120, %126 : vector<8x32xf32>
    %130 = arith.addf %128, %129 : vector<8x32xf32>
    %131 = math.tanh %130 : vector<8x32xf32>
    %132 = arith.mulf %127, %131 : vector<8x32xf32>
    %c5_i32 = arith.constant 5 : i32
    %c8_i32_44 = arith.constant 8 : i32
    %133 = arith.muli %c5_i32, %c8_i32_44 : i32
    %134 = tpu.assume_multiple %133, 8 : i32
    %135 = arith.index_cast %134 : i32 to index
    %c0_45 = arith.constant 0 : index
    %136 = vector.load %arg5[%135, %c0_45] : memref<64x256xf32, #tpu.memory_space<vmem>>, vector<8x128xf32>
    %cst_46 = arith.constant dense<0.000000e+00> : vector<8x128xf32>
    %137 = tpu.matmul %132, %8, %cst_46 {dimension_numbers = #tpu.dot_dimension_numbers<[1], [0], [0], [1], [0, 0, 1, 1], [], []>} : vector<8x32xf32>, vector<32x128xf32>, vector<8x128xf32> -> vector<8x128xf32>
    %138 = arith.addf %136, %137 : vector<8x128xf32>
    %139 = arith.negf %138 : vector<8x128xf32>
    %140 = math.exp %139 : vector<8x128xf32>
    %cst_47 = arith.constant 1.000000e+00 : f32
    %141 = vector.broadcast %cst_47 : f32 to vector<8x128xf32>
    %142 = arith.addf %141, %140 : vector<8x128xf32>
    %143 = arith.divf %141, %142 : vector<8x128xf32>
    %144 = vector.extract_strided_slice %143 {offsets = [0, 0], sizes = [8, 32], strides = [1, 1]} : vector<8x128xf32> to vector<8x32xf32>
    %145 = vector.extract_strided_slice %143 {offsets = [0, 32], sizes = [8, 32], strides = [1, 1]} : vector<8x128xf32> to vector<8x32xf32>
    %146 = vector.extract_strided_slice %143 {offsets = [0, 64], sizes = [8, 32], strides = [1, 1]} : vector<8x128xf32> to vector<8x32xf32>
    %cst_48 = arith.constant 2.000000e+00 : f32
    %147 = vector.broadcast %cst_48 : f32 to vector<8x32xf32>
    %148 = arith.mulf %147, %146 : vector<8x32xf32>
    %cst_49 = arith.constant 1.000000e+00 : f32
    %149 = vector.broadcast %cst_49 : f32 to vector<8x32xf32>
    %150 = arith.subf %148, %149 : vector<8x32xf32>
    %151 = vector.extract_strided_slice %143 {offsets = [0, 96], sizes = [8, 32], strides = [1, 1]} : vector<8x128xf32> to vector<8x32xf32>
    %152 = arith.mulf %145, %130 : vector<8x32xf32>
    %153 = arith.mulf %144, %150 : vector<8x32xf32>
    %154 = arith.addf %152, %153 : vector<8x32xf32>
    %155 = math.tanh %154 : vector<8x32xf32>
    %156 = arith.mulf %151, %155 : vector<8x32xf32>
    %c6_i32 = arith.constant 6 : i32
    %c8_i32_50 = arith.constant 8 : i32
    %157 = arith.muli %c6_i32, %c8_i32_50 : i32
    %158 = tpu.assume_multiple %157, 8 : i32
    %159 = arith.index_cast %158 : i32 to index
    %c0_51 = arith.constant 0 : index
    %160 = vector.load %arg5[%159, %c0_51] : memref<64x256xf32, #tpu.memory_space<vmem>>, vector<8x128xf32>
    %cst_52 = arith.constant dense<0.000000e+00> : vector<8x128xf32>
    %161 = tpu.matmul %156, %8, %cst_52 {dimension_numbers = #tpu.dot_dimension_numbers<[1], [0], [0], [1], [0, 0, 1, 1], [], []>} : vector<8x32xf32>, vector<32x128xf32>, vector<8x128xf32> -> vector<8x128xf32>
    %162 = arith.addf %160, %161 : vector<8x128xf32>
    %163 = arith.negf %162 : vector<8x128xf32>
    %164 = math.exp %163 : vector<8x128xf32>
    %cst_53 = arith.constant 1.000000e+00 : f32
    %165 = vector.broadcast %cst_53 : f32 to vector<8x128xf32>
    %166 = arith.addf %165, %164 : vector<8x128xf32>
    %167 = arith.divf %165, %166 : vector<8x128xf32>
    %168 = vector.extract_strided_slice %167 {offsets = [0, 0], sizes = [8, 32], strides = [1, 1]} : vector<8x128xf32> to vector<8x32xf32>
    %169 = vector.extract_strided_slice %167 {offsets = [0, 32], sizes = [8, 32], strides = [1, 1]} : vector<8x128xf32> to vector<8x32xf32>
    %170 = vector.extract_strided_slice %167 {offsets = [0, 64], sizes = [8, 32], strides = [1, 1]} : vector<8x128xf32> to vector<8x32xf32>
    %cst_54 = arith.constant 2.000000e+00 : f32
    %171 = vector.broadcast %cst_54 : f32 to vector<8x32xf32>
    %172 = arith.mulf %171, %170 : vector<8x32xf32>
    %cst_55 = arith.constant 1.000000e+00 : f32
    %173 = vector.broadcast %cst_55 : f32 to vector<8x32xf32>
    %174 = arith.subf %172, %173 : vector<8x32xf32>
    %175 = vector.extract_strided_slice %167 {offsets = [0, 96], sizes = [8, 32], strides = [1, 1]} : vector<8x128xf32> to vector<8x32xf32>
    %176 = arith.mulf %169, %154 : vector<8x32xf32>
    %177 = arith.mulf %168, %174 : vector<8x32xf32>
    %178 = arith.addf %176, %177 : vector<8x32xf32>
    %179 = math.tanh %178 : vector<8x32xf32>
    %180 = arith.mulf %175, %179 : vector<8x32xf32>
    %c7_i32 = arith.constant 7 : i32
    %c8_i32_56 = arith.constant 8 : i32
    %181 = arith.muli %c7_i32, %c8_i32_56 : i32
    %182 = tpu.assume_multiple %181, 8 : i32
    %183 = arith.index_cast %182 : i32 to index
    %c0_57 = arith.constant 0 : index
    %184 = vector.load %arg5[%183, %c0_57] : memref<64x256xf32, #tpu.memory_space<vmem>>, vector<8x128xf32>
    %cst_58 = arith.constant dense<0.000000e+00> : vector<8x128xf32>
    %185 = tpu.matmul %180, %8, %cst_58 {dimension_numbers = #tpu.dot_dimension_numbers<[1], [0], [0], [1], [0, 0, 1, 1], [], []>} : vector<8x32xf32>, vector<32x128xf32>, vector<8x128xf32> -> vector<8x128xf32>
    %186 = arith.addf %184, %185 : vector<8x128xf32>
    %187 = arith.negf %186 : vector<8x128xf32>
    %188 = math.exp %187 : vector<8x128xf32>
    %cst_59 = arith.constant 1.000000e+00 : f32
    %189 = vector.broadcast %cst_59 : f32 to vector<8x128xf32>
    %190 = arith.addf %189, %188 : vector<8x128xf32>
    %191 = arith.divf %189, %190 : vector<8x128xf32>
    %192 = vector.extract_strided_slice %191 {offsets = [0, 0], sizes = [8, 32], strides = [1, 1]} : vector<8x128xf32> to vector<8x32xf32>
    %193 = vector.extract_strided_slice %191 {offsets = [0, 32], sizes = [8, 32], strides = [1, 1]} : vector<8x128xf32> to vector<8x32xf32>
    %194 = vector.extract_strided_slice %191 {offsets = [0, 64], sizes = [8, 32], strides = [1, 1]} : vector<8x128xf32> to vector<8x32xf32>
    %cst_60 = arith.constant 2.000000e+00 : f32
    %195 = vector.broadcast %cst_60 : f32 to vector<8x32xf32>
    %196 = arith.mulf %195, %194 : vector<8x32xf32>
    %cst_61 = arith.constant 1.000000e+00 : f32
    %197 = vector.broadcast %cst_61 : f32 to vector<8x32xf32>
    %198 = arith.subf %196, %197 : vector<8x32xf32>
    %199 = vector.extract_strided_slice %191 {offsets = [0, 96], sizes = [8, 32], strides = [1, 1]} : vector<8x128xf32> to vector<8x32xf32>
    %200 = arith.mulf %193, %178 : vector<8x32xf32>
    %201 = arith.mulf %192, %198 : vector<8x32xf32>
    %202 = arith.addf %200, %201 : vector<8x32xf32>
    %203 = math.tanh %202 : vector<8x32xf32>
    %204 = arith.mulf %199, %203 : vector<8x32xf32>
    %c8_i32_62 = arith.constant 8 : i32
    %c56 = arith.constant 56 : index
    %c128_63 = arith.constant 128 : index
    %205 = vector.load %arg5[%c56, %c128_63] : memref<64x256xf32, #tpu.memory_space<vmem>>, vector<8x128xf32>
    %206 = arith.negf %205 : vector<8x128xf32>
    %207 = math.exp %206 : vector<8x128xf32>
    %cst_64 = arith.constant 1.000000e+00 : f32
    %208 = vector.broadcast %cst_64 : f32 to vector<8x128xf32>
    %209 = arith.addf %208, %207 : vector<8x128xf32>
    %210 = arith.divf %208, %209 : vector<8x128xf32>
    %211 = vector.extract_strided_slice %210 {offsets = [0, 0], sizes = [8, 32], strides = [1, 1]} : vector<8x128xf32> to vector<8x32xf32>
    %212 = vector.extract_strided_slice %210 {offsets = [0, 64], sizes = [8, 32], strides = [1, 1]} : vector<8x128xf32> to vector<8x32xf32>
    %cst_65 = arith.constant 2.000000e+00 : f32
    %213 = vector.broadcast %cst_65 : f32 to vector<8x32xf32>
    %214 = arith.mulf %213, %212 : vector<8x32xf32>
    %cst_66 = arith.constant 1.000000e+00 : f32
    %215 = vector.broadcast %cst_66 : f32 to vector<8x32xf32>
    %216 = arith.subf %214, %215 : vector<8x32xf32>
    %217 = vector.extract_strided_slice %210 {offsets = [0, 96], sizes = [8, 32], strides = [1, 1]} : vector<8x128xf32> to vector<8x32xf32>
    %218 = arith.mulf %211, %216 : vector<8x32xf32>
    %219 = math.tanh %218 : vector<8x32xf32>
    %220 = arith.mulf %217, %219 : vector<8x32xf32>
    %cst_67 = arith.constant dense<0.000000e+00> : vector<8x128xf32>
    %221 = tpu.matmul %204, %9, %cst_67 {dimension_numbers = #tpu.dot_dimension_numbers<[1], [0], [0], [1], [0, 0, 1, 1], [], []>} : vector<8x32xf32>, vector<32x128xf32>, vector<8x128xf32> -> vector<8x128xf32>
    %cst_68 = arith.constant dense<0.000000e+00> : vector<8x128xf32>
    %222 = tpu.matmul %220, %10, %cst_68 {dimension_numbers = #tpu.dot_dimension_numbers<[1], [0], [0], [1], [0, 0, 1, 1], [], []>} : vector<8x32xf32>, vector<32x128xf32>, vector<8x128xf32> -> vector<8x128xf32>
    %223 = arith.addf %221, %222 : vector<8x128xf32>
    %224 = vector.broadcast %11 : vector<1x128xf32> to vector<8x128xf32>
    %225 = arith.addf %223, %224 : vector<8x128xf32>
    %c0_69 = arith.constant 0 : index
    %c0_70 = arith.constant 0 : index
    %226 = vector.load %arg3[%c0_69, %c0_70] : memref<8x128xf32, #tpu.memory_space<vmem>>, vector<8x128xf32>
    tpu.vector_store %arg3[%c0_69, %c0_70], %225 {strides = array<i32>} : memref<8x128xf32, #tpu.memory_space<vmem>>, vector<8x128xf32>,
    return
  }
}

</mosaic_0001>

<llo_original>
// kernel: blstm_forward.1
$region0: #{blstm_forward.1}
  #allocation0 [shape = 'u32[]', space=smem, size = 0x4, offset = 0x4, fixed_abs, tag = 'smem constant byte address 0x4 - core index']
  #allocation1 [shape = 'u32[144,128]{1,0:T(1,128)}', space=vmem, size = 0x12000, scoped, tag = 'internal scratch']
  #allocation2 [shape = 'f32[64,64]{1,0:T(8,128)}', space=vmem, size = 0x8000, scoped, tag = 'scratch operand']
  #allocation3 [shape = 'f32[64,256]{1,0:T(8,128)}', space=vmem, size = 0x10000, scoped, tag = 'scratch operand']
  %s0 = inlined_call_operand.vmem [shape: s32[64], index: 0, kind: input, shape index: {}]
  %s1 = inlined_call_operand.vmem [shape: f32[504,64], index: 1, kind: input, shape index: {}]
  %s2 = inlined_call_operand.vmem [shape: f32[136,256], index: 2, kind: input, shape index: {}]
  %s3 = inlined_call_operand.vmem [shape: f32[8,128], index: 3, kind: output, shape index: {}]
  %s4 = sld [smem:[#allocation0]]
  $region33: #{blstm_forward.1} parent=0
    _
  %s6 = ssub.s32 1, %s4
  %s7 = scalar_select 0, %s6, %s4
  $region1: #{blstm_forward.1} parent=0
    #allocation4 [shape = 'u8[512]{0}', space=smem, size = 0x200, scoped, tag = 'input window, operand 0, single buffered']
    #allocation5 [shape = 's32[1]{0}', space=sflag, size = 0x4, scoped, tag = 'scoped memory for blstm_forward.1']
    %8 = vsyncpa [#allocation5], 0
    // Predicated region
    $region2: #{blstm_forward.1} parent=1 // pred_check
      _
    $region3: #{blstm_forward.1} parent=1 // pred_check_branch
      %10 = sbr.rel (0) target = $region5
    $region4: #{blstm_forward.1} parent=1 // pred_region
      %s12 = ssub.s32 16, 16
      %13 = vsyncadd [#allocation5], %s12
      %s15 = sshll.u32 %s0, 4
      %s16 = int_to_ptr.vmem [resolvable:$true] %s15
      %18 = dma.vmem_to_smem %s16, 16, [#allocation4], [#allocation5]
    $region5: #{blstm_forward.1} parent=1 // pred_fallthru
      _
    // Predicated region
    $region6: #{blstm_forward.1} parent=1 // pred_check
      _
    $region7: #{blstm_forward.1} parent=1 // pred_check_branch
      %20 = sbr.rel (0) target = $region9
    $region8: #{blstm_forward.1} parent=1 // pred_region
      _
    $region9: #{blstm_forward.1} parent=1 // pred_fallthru
      _
    // Predicated region
    $region10: #{blstm_forward.1} parent=1 // pred_check
      _
    $region11: #{blstm_forward.1} parent=1 // pred_check_branch
      %22 = sbr.rel (0) target = $region13
    $region12: #{blstm_forward.1} parent=1 // pred_region
      _
    $region13: #{blstm_forward.1} parent=1 // pred_fallthru
      _
    // Predicated region
    $region14: #{blstm_forward.1} parent=1 // pred_check
      _
    $region15: #{blstm_forward.1} parent=1 // pred_check_branch
      %24 = sbr.rel (0) target = $region17
    $region16: #{blstm_forward.1} parent=1 // pred_region
      %25 = dma.done [#allocation5], 16
    $region17: #{blstm_forward.1} parent=1 // pred_fallthru
      _
    %26 = sfence
    loop: start=0, step=1, limit=64
    $region18: #{blstm_forward.1} parent=1 // loop_pre_header
      _
    $region19: #{blstm_forward.1} parent=1 // loop_header
      %s28 = sphi 0, %s32
      %p29 = scmp.ge.s32.totalorder %s28, 64
    $region20: #{blstm_forward.1} parent=1 // loop_header_branch
      %31 = sbr.rel (%p29) target = $region24
    $region21: #{blstm_forward.1} parent=1 // loop_body
      %s33 = sld [smem:[#allocation4 + %s28]]
      %s34 = scalar_lea.vmem %s1, %s33
      %v35 = vld [vmem:[%s34] sm:$0x1]
      %s36 = scalar_lea.vmem [#allocation2], %s28
      %vm37 = vcmask 516096
      %38 = vst.msk [vmem:[%s36] sm:$0x1] %vm37, %v35
    $region22: #{blstm_forward.1} parent=1 // loop_footer
      %s32 = sadd.s32 1, %s28
    $region23: #{blstm_forward.1} parent=1 // loop_footer_branch
      %27 = sbr.rel target = $region19
    $region24: #{blstm_forward.1} parent=1 // loop_exit
      _
    %v39 = vld [vmem:[%s2] sm:$0xff]
    %v40 = vld [vmem:[%s2 + $0x8] sm:$0xff]
    %v41 = vld [vmem:[%s2 + $0x10] sm:$0xff]
    %v42 = vld [vmem:[%s2 + $0x18] sm:$0xff]
    %v43 = vld [vmem:[%s2 + $0x20] sm:$0xff]
    %v44 = vld [vmem:[%s2 + $0x28] sm:$0xff]
    %v45 = vld [vmem:[%s2 + $0x30] sm:$0xff]
    %v46 = vld [vmem:[%s2 + $0x38] sm:$0xff]
    %v47 = vld [vmem:[%s2 + $0x40] sm:$0xff]
    %v48 = vld [vmem:[%s2 + $0x48] sm:$0xff]
    %v49 = vld [vmem:[%s2 + $0x50] sm:$0xff]
    %v50 = vld [vmem:[%s2 + $0x58] sm:$0xff]
    %v51 = vld [vmem:[%s2 + $0x60] sm:$0xff]
    %v52 = vld [vmem:[%s2 + $0x68] sm:$0xff]
    %v53 = vld [vmem:[%s2 + $0x70] sm:$0xff]
    %v54 = vld [vmem:[%s2 + $0x78] sm:$0xff]
    %s55 = scalar_lea.vmem %s2, 128
    %v56 = vld [vmem:[%s55] ss:$8 sm:$0x3]
    %v57 = vld [vmem:[#allocation2] sm:$0xff]
    %v58 = vld [vmem:[#allocation2 + $0x8] sm:$0xff]
    %v59 = vld [vmem:[#allocation2 + $0x10] sm:$0xff]
    %v60 = vld [vmem:[#allocation2 + $0x18] sm:$0xff]
    %v61 = vld [vmem:[#allocation2 + $0x20] sm:$0xff]
    %v62 = vld [vmem:[#allocation2 + $0x28] sm:$0xff]
    %v63 = vld [vmem:[#allocation2 + $0x30] sm:$0xff]
    %v64 = vld [vmem:[#allocation2 + $0x38] sm:$0xff]
    %v66 = vlaneseq
    %v67 = vshrl.u32 %v66, 7
    %v68 = vsub.s32 0, %v67
    %v69 = vrot.slane %v56, %v68
    %v70 = vlaneseq
    %v71 = vshrl.u32 %v70, 7
    %v72 = vsub.s32 1, %v71
    %v73 = vrot.slane %v56, %v72
    %vm76 = vcmask 523264
    %v78 = vsel %vm76, %v57, 0
    %v81 = vsel %vm76, %v58, 0
    %v84 = vsel %vm76, %v59, 0
    %v87 = vsel %vm76, %v60, 0
    %v90 = vsel %vm76, %v61, 0
    %v93 = vsel %vm76, %v62, 0
    %v96 = vsel %vm76, %v63, 0
    %v99 = vsel %vm76, %v64, 0
    %101 = vmatprep.subr.mxu0 %v40
    %102 = vmatpush1.msra.mxu0 %v39
    %103 = vmatprep.subr.mxu0 %v42
    %104 = vmatpush1.msra.mxu0 %v41
    %105 = vmatprep.subr.mxu0 %v44
    %106 = vmatpush1.msra.mxu0 %v43
    %107 = vmatprep.subr.mxu0 %v46
    %108 = vmatpush1.msra.mxu0 %v45
    %109 = vmatprep.subr.mxu0 %v48
    %110 = vmatpush1.msra.mxu0 %v47
    %111 = vmatprep.subr.mxu0 %v50
    %112 = vmatpush1.msra.mxu0 %v49
    %113 = vmatprep.subr.mxu0 %v52
    %114 = vmatpush1.msra.mxu0 %v51
    %115 = vmatprep.subr.mxu0 %v54
    %116 = vmatpush1.msra.mxu0 %v53
    %117 = vmatprep.subr.mxu0 0.0
    %118 = vmatpush1.msra.mxu0 0.0
    %119 = vmatprep.subr.mxu0 0.0
    %120 = vmatpush1.msra.mxu0 0.0
    %121 = vmatprep.subr.mxu0 0.0
    %122 = vmatpush1.msra.mxu0 0.0
    %123 = vmatprep.subr.mxu0 0.0
    %124 = vmatpush1.msra.mxu0 0.0
    %125 = vmatprep.subr.mxu0 0.0
    %126 = vmatpush1.msra.mxu0 0.0
    %127 = vmatprep.subr.mxu0 0.0
    %128 = vmatpush1.msra.mxu0 0.0
    %129 = vmatprep.subr.mxu0 0.0
    %130 = vmatpush1.msra.mxu0 0.0
    %131 = vmatprep.subr.mxu0 0.0
    %132 = vmatpush1.msra.mxu0 0.0
    %133 = vmatprep.subr.mxu0 0.0
    %134 = vmatpush1.msra.mxu0 0.0
    %135 = vmatprep.subr.mxu0 0.0
    %136 = vmatpush1.msra.mxu0 0.0
    %137 = vmatprep.subr.mxu0 0.0
    %138 = vmatpush1.msra.mxu0 0.0
    %139 = vmatprep.subr.mxu0 0.0
    %140 = vmatpush1.msra.mxu0 0.0
    %141 = vmatprep.subr.mxu0 0.0
    %142 = vmatpush1.msra.mxu0 0.0
    %143 = vmatprep.subr.mxu0 0.0
    %144 = vmatpush1.msra.mxu0 0.0
    %145 = vmatprep.subr.mxu0 0.0
    %146 = vmatpush1.msra.mxu0 0.0
    %147 = vmatprep.subr.mxu0 0.0
    %148 = vmatpush1.msra.mxu0 0.0
    %149 = vmatprep.subr.mxu0 0.0
    %150 = vmatpush1.msra.mxu0 0.0
    %151 = vmatprep.subr.mxu0 0.0
    %152 = vmatpush1.msra.mxu0 0.0
    %153 = vmatprep.subr.mxu0 0.0
    %154 = vmatpush1.msra.mxu0 0.0
    %155 = vmatprep.subr.mxu0 0.0
    %156 = vmatpush1.msra.mxu0 0.0
    %157 = vmatprep.subr.mxu0 0.0
    %158 = vmatpush1.msra.mxu0 0.0
    %159 = vmatprep.subr.mxu0 0.0
    %160 = vmatpush1.msra.mxu0 0.0
    %161 = vmatprep.subr.mxu0 0.0
    %162 = vmatpush1.msra.mxu0 0.0
    %163 = vmatprep.subr.mxu0 0.0
    %164 = vmatpush1.msra.mxu0 0.0
    %165 = vmatprep.mubr.f32.mxu0 0.0
    %166 = vmatmul.mubr.f32.gmra.mrb[0].mxu0 %v78
    %v167 = vpop.f32.mrb[0].mxu0
    %v168 = vadd.f32 %v69, %v167
    %v169 = vpop.f32.mrb[0].mxu0
    %v170 = vadd.f32 %v73, %v169
    %171 = vmatprep.mubr.f32.mxu0 0.0
    %172 = vmatmul.mubr.f32.gmra.mrb[0].mxu0 %v81
    %v173 = vpop.f32.mrb[0].mxu0
    %v174 = vadd.f32 %v69, %v173
    %v175 = vpop.f32.mrb[0].mxu0
    %v176 = vadd.f32 %v73, %v175
    %177 = vmatprep.mubr.f32.mxu0 0.0
    %178 = vmatmul.mubr.f32.gmra.mrb[0].mxu0 %v84
    %v179 = vpop.f32.mrb[0].mxu0
    %v180 = vadd.f32 %v69, %v179
    %v181 = vpop.f32.mrb[0].mxu0
    %v182 = vadd.f32 %v73, %v181
    %183 = vmatprep.mubr.f32.mxu0 0.0
    %184 = vmatmul.mubr.f32.gmra.mrb[0].mxu0 %v87
    %v185 = vpop.f32.mrb[0].mxu0
    %v186 = vadd.f32 %v69, %v185
    %v187 = vpop.f32.mrb[0].mxu0
    %v188 = vadd.f32 %v73, %v187
    %189 = vmatprep.mubr.f32.mxu0 0.0
    %190 = vmatmul.mubr.f32.gmra.mrb[0].mxu0 %v90
    %v191 = vpop.f32.mrb[0].mxu0
    %v192 = vadd.f32 %v69, %v191
    %v193 = vpop.f32.mrb[0].mxu0
    %v194 = vadd.f32 %v73, %v193
    %195 = vmatprep.mubr.f32.mxu0 0.0
    %196 = vmatmul.mubr.f32.gmra.mrb[0].mxu0 %v93
    %v197 = vpop.f32.mrb[0].mxu0
    %v198 = vadd.f32 %v69, %v197
    %v199 = vpop.f32.mrb[0].mxu0
    %v200 = vadd.f32 %v73, %v199
    %201 = vmatprep.mubr.f32.mxu0 0.0
    %202 = vmatmul.mubr.f32.gmra.mrb[0].mxu0 %v96
    %v203 = vpop.f32.mrb[0].mxu0
    %v204 = vadd.f32 %v69, %v203
    %v205 = vpop.f32.mrb[0].mxu0
    %v206 = vadd.f32 %v73, %v205
    %207 = vmatprep.mubr.f32.mxu0 0.0
    %208 = vmatmul.mubr.f32.gmra.mrb[0].mxu0 %v99
    %v209 = vpop.f32.mrb[0].mxu0
    %v210 = vadd.f32 %v69, %v209
    %v211 = vpop.f32.mrb[0].mxu0
    %v212 = vadd.f32 %v73, %v211
    %213 = vdwg.mxu0
    %214 = vst [vmem:[#allocation3] sm:$0xff] %v168
    %215 = vst [vmem:[#allocation3 + $0x8] sm:$0xff] %v170
    %216 = vst [vmem:[#allocation3 + $0x10] sm:$0xff] %v174
    %217 = vst [vmem:[#allocation3 + $0x18] sm:$0xff] %v176
    %218 = vst [vmem:[#allocation3 + $0x20] sm:$0xff] %v180
    %219 = vst [vmem:[#allocation3 + $0x28] sm:$0xff] %v182
    %220 = vst [vmem:[#allocation3 + $0x30] sm:$0xff] %v186
    %221 = vst [vmem:[#allocation3 + $0x38] sm:$0xff] %v188
    %222 = vst [vmem:[#allocation3 + $0x40] sm:$0xff] %v192
    %223 = vst [vmem:[#allocation3 + $0x48] sm:$0xff] %v194
    %224 = vst [vmem:[#allocation3 + $0x50] sm:$0xff] %v198
    %225 = vst [vmem:[#allocation3 + $0x58] sm:$0xff] %v200
    %226 = vst [vmem:[#allocation3 + $0x60] sm:$0xff] %v204
    %227 = vst [vmem:[#allocation3 + $0x68] sm:$0xff] %v206
    %228 = vst [vmem:[#allocation3 + $0x70] sm:$0xff] %v210
    %229 = vst [vmem:[#allocation3 + $0x78] sm:$0xff] %v212
    %v230 = vld [vmem:[%s2 + $0x90] sm:$0xff]
    %v231 = vld [vmem:[%s2 + $0xa0] sm:$0xff]
    %v232 = vld [vmem:[%s2 + $0xb0] sm:$0xff]
    %v233 = vld [vmem:[%s2 + $0xc0] sm:$0xff]
    %v234 = vld [vmem:[%s2 + $0x98] sm:$0xff]
    %v235 = vld [vmem:[%s2 + $0xa8] sm:$0xff]
    %v236 = vld [vmem:[%s2 + $0xb8] sm:$0xff]
    %v237 = vld [vmem:[%s2 + $0xc8] sm:$0xff]
    %v238 = vld [vmem:[%s2 + $0xd0] sm:$0xff]
    %v239 = vld [vmem:[%s2 + $0xe0] sm:$0xff]
    %v240 = vld [vmem:[%s2 + $0xf0] sm:$0xff]
    %v241 = vld [vmem:[%s2 + $0x100] sm:$0xff]
    %v242 = vld [vmem:[%s2 + $0xd8] ss:$0 sm:$0xff]
    %s243 = smul.u32 0, 2
    %s244 = smul.addr %s243, 8
    %s245 = scalar_lea.vmem [#allocation3], %s244
    %v246 = vld [vmem:[%s245] sm:$0xff]
    %vm247 = vcmask 261120
    %v249 = vsel %vm247, 0.0, 0
    %251 = vmatprep.subr.mxu0 0.0
    %252 = vmatpush1.msra.mxu0 %v230
    %253 = vmatprep.subr.mxu0 0.0
    %254 = vmatpush1.msra.mxu0 %v231
    %255 = vmatprep.subr.mxu0 0.0
    %256 = vmatpush1.msra.mxu0 %v232
    %257 = vmatprep.subr.mxu0 0.0
    %258 = vmatpush1.msra.mxu0 %v233
    %259 = vmatprep.subr.mxu0 0.0
    %260 = vmatpush1.msra.mxu0 0.0
    %261 = vmatprep.subr.mxu0 0.0
    %262 = vmatpush1.msra.mxu0 0.0
    %263 = vmatprep.subr.mxu0 0.0
    %264 = vmatpush1.msra.mxu0 0.0
    %265 = vmatprep.subr.mxu0 0.0
    %266 = vmatpush1.msra.mxu0 0.0
    %267 = vmatprep.subr.mxu0 0.0
    %268 = vmatpush1.msra.mxu0 0.0
    %269 = vmatprep.subr.mxu0 0.0
    %270 = vmatpush1.msra.mxu0 0.0
    %271 = vmatprep.subr.mxu0 0.0
    %272 = vmatpush1.msra.mxu0 0.0
    %273 = vmatprep.subr.mxu0 0.0
    %274 = vmatpush1.msra.mxu0 0.0
    %275 = vmatprep.subr.mxu0 0.0
    %276 = vmatpush1.msra.mxu0 0.0
    %277 = vmatprep.subr.mxu0 0.0
    %278 = vmatpush1.msra.mxu0 0.0
    %279 = vmatprep.subr.mxu0 0.0
    %280 = vmatpush1.msra.mxu0 0.0
    %281 = vmatprep.subr.mxu0 0.0
    %282 = vmatpush1.msra.mxu0 0.0
    %283 = vmatprep.subr.mxu0 0.0
    %284 = vmatpush1.msra.mxu0 0.0
    %285 = vmatprep.subr.mxu0 0.0
    %286 = vmatpush1.msra.mxu0 0.0
    %287 = vmatprep.subr.mxu0 0.0
    %288 = vmatpush1.msra.mxu0 0.0
    %289 = vmatprep.subr.mxu0 0.0
    %290 = vmatpush1.msra.mxu0 0.0
    %291 = vmatprep.subr.mxu0 0.0
    %292 = vmatpush1.msra.mxu0 0.0
    %293 = vmatprep.subr.mxu0 0.0
    %294 = vmatpush1.msra.mxu0 0.0
    %295 = vmatprep.subr.mxu0 0.0
    %296 = vmatpush1.msra.mxu0 0.0
    %297 = vmatprep.subr.mxu0 0.0
    %298 = vmatpush1.msra.mxu0 0.0
    %299 = vmatprep.subr.mxu0 0.0
    %300 = vmatpush1.msra.mxu0 0.0
    %301 = vmatprep.subr.mxu0 0.0
    %302 = vmatpush1.msra.mxu0 0.0
    %303 = vmatprep.subr.mxu0 0.0
    %304 = vmatpush1.msra.mxu0 0.0
    %305 = vmatprep.subr.mxu0 0.0
    %306 = vmatpush1.msra.mxu0 0.0
    %307 = vmatprep.subr.mxu0 0.0
    %308 = vmatpush1.msra.mxu0 0.0
    %309 = vmatprep.subr.mxu0 0.0
    %310 = vmatpush1.msra.mxu0 0.0
    %311 = vmatprep.subr.mxu0 0.0
    %312 = vmatpush1.msra.mxu0 0.0
    %313 = vmatprep.subr.mxu0 0.0
    %314 = vmatpush1.msra.mxu0 0.0
    %315 = vmatprep.mubr.f32.mxu0 0.0
    %316 = vmatmul.mubr.f32.gmra.mrb[0].mxu0 %v249
    %v317 = vpop.f32.mrb[0].mxu0
    %v318 = vadd.f32 0.0, %v317
    %v319 = vpop.f32.mrb[0].mxu0
    %320 = vdwg.mxu0
    %v321 = vadd.f32 %v246, %v318
    %v322 = vxor.u32 %v321, 2147483648
    %v323 = vmul.f32 %v322, 1.442695
    %v324 = vpow.pop %v323
    %v325 = vadd.f32 %v324, 1.0
    %v326 = vrcp.pop %v325
    %v327 = vmul.f32 1.0, %v326
    %v328 = vmul.f32 %v327, 2.0
    %v329 = vsub.f32 %v328, 1.0
    %v330 = vmul.f32 %v327, 0.0
    %332 = vrot.lane.b32.xlu0 %v329, 64
    %v333 = vpop.permute.xlu0 %332
    %v335 = vmul.f32 %v327, %v333
    %337 = vrot.lane.b32.xlu0 %v335, 32
    %v338 = vpop.permute.xlu0 %337
    %v340 = vadd.f32 %v330, %v338
    %v341 = vtanh.pop %v340
    %343 = vrot.lane.b32.xlu0 %v341, 64
    %v344 = vpop.permute.xlu0 %343
    %v346 = vmul.f32 %v327, %v344
    %s347 = smul.u32 1, 2
    %s348 = smul.addr %s347, 8
    %s349 = scalar_lea.vmem [#allocation3], %s348
    %v350 = vld [vmem:[%s349] sm:$0xff]
    %352 = vrot.lane.b32.xlu0 %v346, 32
    %v353 = vpop.permute.xlu0 %352
    %v354 = vsel %vm247, %v353, 0
    %356 = vmatprep.subr.mxu0 0.0
    %357 = vmatpush1.msra.mxu0 %v230
    %358 = vmatprep.subr.mxu0 0.0
    %359 = vmatpush1.msra.mxu0 %v231
    %360 = vmatprep.subr.mxu0 0.0
    %361 = vmatpush1.msra.mxu0 %v232
    %362 = vmatprep.subr.mxu0 0.0
    %363 = vmatpush1.msra.mxu0 %v233
    %364 = vmatprep.subr.mxu0 0.0
    %365 = vmatpush1.msra.mxu0 0.0
    %366 = vmatprep.subr.mxu0 0.0
    %367 = vmatpush1.msra.mxu0 0.0
    %368 = vmatprep.subr.mxu0 0.0
    %369 = vmatpush1.msra.mxu0 0.0
    %370 = vmatprep.subr.mxu0 0.0
    %371 = vmatpush1.msra.mxu0 0.0
    %372 = vmatprep.subr.mxu0 0.0
    %373 = vmatpush1.msra.mxu0 0.0
    %374 = vmatprep.subr.mxu0 0.0
    %375 = vmatpush1.msra.mxu0 0.0
    %376 = vmatprep.subr.mxu0 0.0
    %377 = vmatpush1.msra.mxu0 0.0
    %378 = vmatprep.subr.mxu0 0.0
    %379 = vmatpush1.msra.mxu0 0.0
    %380 = vmatprep.subr.mxu0 0.0
    %381 = vmatpush1.msra.mxu0 0.0
    %382 = vmatprep.subr.mxu0 0.0
    %383 = vmatpush1.msra.mxu0 0.0
    %384 = vmatprep.subr.mxu0 0.0
    %385 = vmatpush1.msra.mxu0 0.0
    %386 = vmatprep.subr.mxu0 0.0
    %387 = vmatpush1.msra.mxu0 0.0
    %388 = vmatprep.subr.mxu0 0.0
    %389 = vmatpush1.msra.mxu0 0.0
    %390 = vmatprep.subr.mxu0 0.0
    %391 = vmatpush1.msra.mxu0 0.0
    %392 = vmatprep.subr.mxu0 0.0
    %393 = vmatpush1.msra.mxu0 0.0
    %394 = vmatprep.subr.mxu0 0.0
    %395 = vmatpush1.msra.mxu0 0.0
    %396 = vmatprep.subr.mxu0 0.0
    %397 = vmatpush1.msra.mxu0 0.0
    %398 = vmatprep.subr.mxu0 0.0
    %399 = vmatpush1.msra.mxu0 0.0
    %400 = vmatprep.subr.mxu0 0.0
    %401 = vmatpush1.msra.mxu0 0.0
    %402 = vmatprep.subr.mxu0 0.0
    %403 = vmatpush1.msra.mxu0 0.0
    %404 = vmatprep.subr.mxu0 0.0
    %405 = vmatpush1.msra.mxu0 0.0
    %406 = vmatprep.subr.mxu0 0.0
    %407 = vmatpush1.msra.mxu0 0.0
    %408 = vmatprep.subr.mxu0 0.0
    %409 = vmatpush1.msra.mxu0 0.0
    %410 = vmatprep.subr.mxu0 0.0
    %411 = vmatpush1.msra.mxu0 0.0
    %412 = vmatprep.subr.mxu0 0.0
    %413 = vmatpush1.msra.mxu0 0.0
    %414 = vmatprep.subr.mxu0 0.0
    %415 = vmatpush1.msra.mxu0 0.0
    %416 = vmatprep.subr.mxu0 0.0
    %417 = vmatpush1.msra.mxu0 0.0
    %418 = vmatprep.subr.mxu0 0.0
    %419 = vmatpush1.msra.mxu0 0.0
    %420 = vmatprep.mubr.f32.mxu0 0.0
    %421 = vmatmul.mubr.f32.gmra.mrb[0].mxu0 %v354
    %v422 = vpop.f32.mrb[0].mxu0
    %v423 = vadd.f32 0.0, %v422
    %v424 = vpop.f32.mrb[0].mxu0
    %425 = vdwg.mxu0
    %v426 = vadd.f32 %v350, %v423
    %v427 = vxor.u32 %v426, 2147483648
    %v428 = vmul.f32 %v427, 1.442695
    %v429 = vpow.pop %v428
    %v430 = vadd.f32 %v429, 1.0
    %v431 = vrcp.pop %v430
    %v432 = vmul.f32 1.0, %v431
    %v433 = vmul.f32 %v432, 2.0
    %v434 = vsub.f32 %v433, 1.0
    %v435 = vmul.f32 %v432, %v340
    %437 = vrot.lane.b32.xlu0 %v434, 64
    %v438 = vpop.permute.xlu0 %437
    %v440 = vmul.f32 %v432, %v438
    %442 = vrot.lane.b32.xlu0 %v440, 32
    %v443 = vpop.permute.xlu0 %442
    %v445 = vadd.f32 %v435, %v443
    %v446 = vtanh.pop %v445
    %448 = vrot.lane.b32.xlu0 %v446, 64
    %v449 = vpop.permute.xlu0 %448
    %v451 = vmul.f32 %v432, %v449
    %s452 = smul.u32 2, 2
    %s453 = smul.addr %s452, 8
    %s454 = scalar_lea.vmem [#allocation3], %s453
    %v455 = vld [vmem:[%s454] sm:$0xff]
    %457 = vrot.lane.b32.xlu0 %v451, 32
    %v458 = vpop.permute.xlu0 %457
    %v459 = vsel %vm247, %v458, 0
    %461 = vmatprep.subr.mxu0 0.0
    %462 = vmatpush1.msra.mxu0 %v230
    %463 = vmatprep.subr.mxu0 0.0
    %464 = vmatpush1.msra.mxu0 %v231
    %465 = vmatprep.subr.mxu0 0.0
    %466 = vmatpush1.msra.mxu0 %v232
    %467 = vmatprep.subr.mxu0 0.0
    %468 = vmatpush1.msra.mxu0 %v233
    %469 = vmatprep.subr.mxu0 0.0
    %470 = vmatpush1.msra.mxu0 0.0
    %471 = vmatprep.subr.mxu0 0.0
    %472 = vmatpush1.msra.mxu0 0.0
    %473 = vmatprep.subr.mxu0 0.0
    %474 = vmatpush1.msra.mxu0 0.0
    %475 = vmatprep.subr.mxu0 0.0
    %476 = vmatpush1.msra.mxu0 0.0
    %477 = vmatprep.subr.mxu0 0.0
    %478 = vmatpush1.msra.mxu0 0.0
    %479 = vmatprep.subr.mxu0 0.0
    %480 = vmatpush1.msra.mxu0 0.0
    %481 = vmatprep.subr.mxu0 0.0
    %482 = vmatpush1.msra.mxu0 0.0
    %483 = vmatprep.subr.mxu0 0.0
    %484 = vmatpush1.msra.mxu0 0.0
    %485 = vmatprep.subr.mxu0 0.0
    %486 = vmatpush1.msra.mxu0 0.0
    %487 = vmatprep.subr.mxu0 0.0
    %488 = vmatpush1.msra.mxu0 0.0
    %489 = vmatprep.subr.mxu0 0.0
    %490 = vmatpush1.msra.mxu0 0.0
    %491 = vmatprep.subr.mxu0 0.0
    %492 = vmatpush1.msra.mxu0 0.0
    %493 = vmatprep.subr.mxu0 0.0
    %494 = vmatpush1.msra.mxu0 0.0
    %495 = vmatprep.subr.mxu0 0.0
    %496 = vmatpush1.msra.mxu0 0.0
    %497 = vmatprep.subr.mxu0 0.0
    %498 = vmatpush1.msra.mxu0 0.0
    %499 = vmatprep.subr.mxu0 0.0
    %500 = vmatpush1.msra.mxu0 0.0
    %501 = vmatprep.subr.mxu0 0.0
    %502 = vmatpush1.msra.mxu0 0.0
    %503 = vmatprep.subr.mxu0 0.0
    %504 = vmatpush1.msra.mxu0 0.0
    %505 = vmatprep.subr.mxu0 0.0
    %506 = vmatpush1.msra.mxu0 0.0
    %507 = vmatprep.subr.mxu0 0.0
    %508 = vmatpush1.msra.mxu0 0.0
    %509 = vmatprep.subr.mxu0 0.0
    %510 = vmatpush1.msra.mxu0 0.0
    %511 = vmatprep.subr.mxu0 0.0
    %512 = vmatpush1.msra.mxu0 0.0
    %513 = vmatprep.subr.mxu0 0.0
    %514 = vmatpush1.msra.mxu0 0.0
    %515 = vmatprep.subr.mxu0 0.0
    %516 = vmatpush1.msra.mxu0 0.0
    %517 = vmatprep.subr.mxu0 0.0
    %518 = vmatpush1.msra.mxu0 0.0
    %519 = vmatprep.subr.mxu0 0.0
    %520 = vmatpush1.msra.mxu0 0.0
    %521 = vmatprep.subr.mxu0 0.0
    %522 = vmatpush1.msra.mxu0 0.0
    %523 = vmatprep.subr.mxu0 0.0
    %524 = vmatpush1.msra.mxu0 0.0
    %525 = vmatprep.mubr.f32.mxu0 0.0
    %526 = vmatmul.mubr.f32.gmra.mrb[0].mxu0 %v459
    %v527 = vpop.f32.mrb[0].mxu0
    %v528 = vadd.f32 0.0, %v527
    %v529 = vpop.f32.mrb[0].mxu0
    %530 = vdwg.mxu0
    %v531 = vadd.f32 %v455, %v528
    %v532 = vxor.u32 %v531, 2147483648
    %v533 = vmul.f32 %v532, 1.442695
    %v534 = vpow.pop %v533
    %v535 = vadd.f32 %v534, 1.0
    %v536 = vrcp.pop %v535
    %v537 = vmul.f32 1.0, %v536
    %v538 = vmul.f32 %v537, 2.0
    %v539 = vsub.f32 %v538, 1.0
    %v540 = vmul.f32 %v537, %v445
    %542 = vrot.lane.b32.xlu0 %v539, 64
    %v543 = vpop.permute.xlu0 %542
    %v545 = vmul.f32 %v537, %v543
    %547 = vrot.lane.b32.xlu0 %v545, 32
    %v548 = vpop.permute.xlu0 %547
    %v550 = vadd.f32 %v540, %v548
    %v551 = vtanh.pop %v550
    %553 = vrot.lane.b32.xlu0 %v551, 64
    %v554 = vpop.permute.xlu0 %553
    %v556 = vmul.f32 %v537, %v554
    %s557 = smul.u32 3, 2
    %s558 = smul.addr %s557, 8
    %s559 = scalar_lea.vmem [#allocation3], %s558
    %v560 = vld [vmem:[%s559] sm:$0xff]
    %562 = vrot.lane.b32.xlu0 %v556, 32
    %v563 = vpop.permute.xlu0 %562
    %v564 = vsel %vm247, %v563, 0
    %566 = vmatprep.subr.mxu0 0.0
    %567 = vmatpush1.msra.mxu0 %v230
    %568 = vmatprep.subr.mxu0 0.0
    %569 = vmatpush1.msra.mxu0 %v231
    %570 = vmatprep.subr.mxu0 0.0
    %571 = vmatpush1.msra.mxu0 %v232
    %572 = vmatprep.subr.mxu0 0.0
    %573 = vmatpush1.msra.mxu0 %v233
    %574 = vmatprep.subr.mxu0 0.0
    %575 = vmatpush1.msra.mxu0 0.0
    %576 = vmatprep.subr.mxu0 0.0
    %577 = vmatpush1.msra.mxu0 0.0
    %578 = vmatprep.subr.mxu0 0.0
    %579 = vmatpush1.msra.mxu0 0.0
    %580 = vmatprep.subr.mxu0 0.0
    %581 = vmatpush1.msra.mxu0 0.0
    %582 = vmatprep.subr.mxu0 0.0
    %583 = vmatpush1.msra.mxu0 0.0
    %584 = vmatprep.subr.mxu0 0.0
    %585 = vmatpush1.msra.mxu0 0.0
    %586 = vmatprep.subr.mxu0 0.0
    %587 = vmatpush1.msra.mxu0 0.0
    %588 = vmatprep.subr.mxu0 0.0
    %589 = vmatpush1.msra.mxu0 0.0
    %590 = vmatprep.subr.mxu0 0.0
    %591 = vmatpush1.msra.mxu0 0.0
    %592 = vmatprep.subr.mxu0 0.0
    %593 = vmatpush1.msra.mxu0 0.0
    %594 = vmatprep.subr.mxu0 0.0
    %595 = vmatpush1.msra.mxu0 0.0
    %596 = vmatprep.subr.mxu0 0.0
    %597 = vmatpush1.msra.mxu0 0.0
    %598 = vmatprep.subr.mxu0 0.0
    %599 = vmatpush1.msra.mxu0 0.0
    %600 = vmatprep.subr.mxu0 0.0
    %601 = vmatpush1.msra.mxu0 0.0
    %602 = vmatprep.subr.mxu0 0.0
    %603 = vmatpush1.msra.mxu0 0.0
    %604 = vmatprep.subr.mxu0 0.0
    %605 = vmatpush1.msra.mxu0 0.0
    %606 = vmatprep.subr.mxu0 0.0
    %607 = vmatpush1.msra.mxu0 0.0
    %608 = vmatprep.subr.mxu0 0.0
    %609 = vmatpush1.msra.mxu0 0.0
    %610 = vmatprep.subr.mxu0 0.0
    %611 = vmatpush1.msra.mxu0 0.0
    %612 = vmatprep.subr.mxu0 0.0
    %613 = vmatpush1.msra.mxu0 0.0
    %614 = vmatprep.subr.mxu0 0.0
    %615 = vmatpush1.msra.mxu0 0.0
    %616 = vmatprep.subr.mxu0 0.0
    %617 = vmatpush1.msra.mxu0 0.0
    %618 = vmatprep.subr.mxu0 0.0
    %619 = vmatpush1.msra.mxu0 0.0
    %620 = vmatprep.subr.mxu0 0.0
    %621 = vmatpush1.msra.mxu0 0.0
    %622 = vmatprep.subr.mxu0 0.0
    %623 = vmatpush1.msra.mxu0 0.0
    %624 = vmatprep.subr.mxu0 0.0
    %625 = vmatpush1.msra.mxu0 0.0
    %626 = vmatprep.subr.mxu0 0.0
    %627 = vmatpush1.msra.mxu0 0.0
    %628 = vmatprep.subr.mxu0 0.0
    %629 = vmatpush1.msra.mxu0 0.0
    %630 = vmatprep.mubr.f32.mxu0 0.0
    %631 = vmatmul.mubr.f32.gmra.mrb[0].mxu0 %v564
    %v632 = vpop.f32.mrb[0].mxu0
    %v633 = vadd.f32 0.0, %v632
    %v634 = vpop.f32.mrb[0].mxu0
    %635 = vdwg.mxu0
    %v636 = vadd.f32 %v560, %v633
    %v637 = vxor.u32 %v636, 2147483648
    %v638 = vmul.f32 %v637, 1.442695
    %v639 = vpow.pop %v638
    %v640 = vadd.f32 %v639, 1.0
    %v641 = vrcp.pop %v640
    %v642 = vmul.f32 1.0, %v641
    %v643 = vmul.f32 %v642, 2.0
    %v644 = vsub.f32 %v643, 1.0
    %v645 = vmul.f32 %v642, %v550
    %647 = vrot.lane.b32.xlu0 %v644, 64
    %v648 = vpop.permute.xlu0 %647
    %v650 = vmul.f32 %v642, %v648
    %652 = vrot.lane.b32.xlu0 %v650, 32
    %v653 = vpop.permute.xlu0 %652
    %v655 = vadd.f32 %v645, %v653
    %v656 = vtanh.pop %v655
    %658 = vrot.lane.b32.xlu0 %v656, 64
    %v659 = vpop.permute.xlu0 %658
    %v661 = vmul.f32 %v642, %v659
    %s662 = smul.u32 4, 2
    %s663 = smul.addr %s662, 8
    %s664 = scalar_lea.vmem [#allocation3], %s663
    %v665 = vld [vmem:[%s664] sm:$0xff]
    %667 = vrot.lane.b32.xlu0 %v661, 32
    %v668 = vpop.permute.xlu0 %667
    %v669 = vsel %vm247, %v668, 0
    %671 = vmatprep.subr.mxu0 0.0
    %672 = vmatpush1.msra.mxu0 %v230
    %673 = vmatprep.subr.mxu0 0.0
    %674 = vmatpush1.msra.mxu0 %v231
    %675 = vmatprep.subr.mxu0 0.0
    %676 = vmatpush1.msra.mxu0 %v232
    %677 = vmatprep.subr.mxu0 0.0
    %678 = vmatpush1.msra.mxu0 %v233
    %679 = vmatprep.subr.mxu0 0.0
    %680 = vmatpush1.msra.mxu0 0.0
    %681 = vmatprep.subr.mxu0 0.0
    %682 = vmatpush1.msra.mxu0 0.0
    %683 = vmatprep.subr.mxu0 0.0
    %684 = vmatpush1.msra.mxu0 0.0
    %685 = vmatprep.subr.mxu0 0.0
    %686 = vmatpush1.msra.mxu0 0.0
    %687 = vmatprep.subr.mxu0 0.0
    %688 = vmatpush1.msra.mxu0 0.0
    %689 = vmatprep.subr.mxu0 0.0
    %690 = vmatpush1.msra.mxu0 0.0
    %691 = vmatprep.subr.mxu0 0.0
    %692 = vmatpush1.msra.mxu0 0.0
    %693 = vmatprep.subr.mxu0 0.0
    %694 = vmatpush1.msra.mxu0 0.0
    %695 = vmatprep.subr.mxu0 0.0
    %696 = vmatpush1.msra.mxu0 0.0
    %697 = vmatprep.subr.mxu0 0.0
    %698 = vmatpush1.msra.mxu0 0.0
    %699 = vmatprep.subr.mxu0 0.0
    %700 = vmatpush1.msra.mxu0 0.0
    %701 = vmatprep.subr.mxu0 0.0
    %702 = vmatpush1.msra.mxu0 0.0
    %703 = vmatprep.subr.mxu0 0.0
    %704 = vmatpush1.msra.mxu0 0.0
    %705 = vmatprep.subr.mxu0 0.0
    %706 = vmatpush1.msra.mxu0 0.0
    %707 = vmatprep.subr.mxu0 0.0
    %708 = vmatpush1.msra.mxu0 0.0
    %709 = vmatprep.subr.mxu0 0.0
    %710 = vmatpush1.msra.mxu0 0.0
    %711 = vmatprep.subr.mxu0 0.0
    %712 = vmatpush1.msra.mxu0 0.0
    %713 = vmatprep.subr.mxu0 0.0
    %714 = vmatpush1.msra.mxu0 0.0
    %715 = vmatprep.subr.mxu0 0.0
    %716 = vmatpush1.msra.mxu0 0.0
    %717 = vmatprep.subr.mxu0 0.0
    %718 = vmatpush1.msra.mxu0 0.0
    %719 = vmatprep.subr.mxu0 0.0
    %720 = vmatpush1.msra.mxu0 0.0
    %721 = vmatprep.subr.mxu0 0.0
    %722 = vmatpush1.msra.mxu0 0.0
    %723 = vmatprep.subr.mxu0 0.0
    %724 = vmatpush1.msra.mxu0 0.0
    %725 = vmatprep.subr.mxu0 0.0
    %726 = vmatpush1.msra.mxu0 0.0
    %727 = vmatprep.subr.mxu0 0.0
    %728 = vmatpush1.msra.mxu0 0.0
    %729 = vmatprep.subr.mxu0 0.0
    %730 = vmatpush1.msra.mxu0 0.0
    %731 = vmatprep.subr.mxu0 0.0
    %732 = vmatpush1.msra.mxu0 0.0
    %733 = vmatprep.subr.mxu0 0.0
    %734 = vmatpush1.msra.mxu0 0.0
    %735 = vmatprep.mubr.f32.mxu0 0.0
    %736 = vmatmul.mubr.f32.gmra.mrb[0].mxu0 %v669
    %v737 = vpop.f32.mrb[0].mxu0
    %v738 = vadd.f32 0.0, %v737
    %v739 = vpop.f32.mrb[0].mxu0
    %740 = vdwg.mxu0
    %v741 = vadd.f32 %v665, %v738
    %v742 = vxor.u32 %v741, 2147483648
    %v743 = vmul.f32 %v742, 1.442695
    %v744 = vpow.pop %v743
    %v745 = vadd.f32 %v744, 1.0
    %v746 = vrcp.pop %v745
    %v747 = vmul.f32 1.0, %v746
    %v748 = vmul.f32 %v747, 2.0
    %v749 = vsub.f32 %v748, 1.0
    %v750 = vmul.f32 %v747, %v655
    %752 = vrot.lane.b32.xlu0 %v749, 64
    %v753 = vpop.permute.xlu0 %752
    %v755 = vmul.f32 %v747, %v753
    %757 = vrot.lane.b32.xlu0 %v755, 32
    %v758 = vpop.permute.xlu0 %757
    %v760 = vadd.f32 %v750, %v758
    %v761 = vtanh.pop %v760
    %763 = vrot.lane.b32.xlu0 %v761, 64
    %v764 = vpop.permute.xlu0 %763
    %v766 = vmul.f32 %v747, %v764
    %s767 = smul.u32 5, 2
    %s768 = smul.addr %s767, 8
    %s769 = scalar_lea.vmem [#allocation3], %s768
    %v770 = vld [vmem:[%s769] sm:$0xff]
    %772 = vrot.lane.b32.xlu0 %v766, 32
    %v773 = vpop.permute.xlu0 %772
    %v774 = vsel %vm247, %v773, 0
    %776 = vmatprep.subr.mxu0 0.0
    %777 = vmatpush1.msra.mxu0 %v230
    %778 = vmatprep.subr.mxu0 0.0
    %779 = vmatpush1.msra.mxu0 %v231
    %780 = vmatprep.subr.mxu0 0.0
    %781 = vmatpush1.msra.mxu0 %v232
    %782 = vmatprep.subr.mxu0 0.0
    %783 = vmatpush1.msra.mxu0 %v233
    %784 = vmatprep.subr.mxu0 0.0
    %785 = vmatpush1.msra.mxu0 0.0
    %786 = vmatprep.subr.mxu0 0.0
    %787 = vmatpush1.msra.mxu0 0.0
    %788 = vmatprep.subr.mxu0 0.0
    %789 = vmatpush1.msra.mxu0 0.0
    %790 = vmatprep.subr.mxu0 0.0
    %791 = vmatpush1.msra.mxu0 0.0
    %792 = vmatprep.subr.mxu0 0.0
    %793 = vmatpush1.msra.mxu0 0.0
    %794 = vmatprep.subr.mxu0 0.0
    %795 = vmatpush1.msra.mxu0 0.0
    %796 = vmatprep.subr.mxu0 0.0
    %797 = vmatpush1.msra.mxu0 0.0
    %798 = vmatprep.subr.mxu0 0.0
    %799 = vmatpush1.msra.mxu0 0.0
    %800 = vmatprep.subr.mxu0 0.0
    %801 = vmatpush1.msra.mxu0 0.0
    %802 = vmatprep.subr.mxu0 0.0
    %803 = vmatpush1.msra.mxu0 0.0
    %804 = vmatprep.subr.mxu0 0.0
    %805 = vmatpush1.msra.mxu0 0.0
    %806 = vmatprep.subr.mxu0 0.0
    %807 = vmatpush1.msra.mxu0 0.0
    %808 = vmatprep.subr.mxu0 0.0
    %809 = vmatpush1.msra.mxu0 0.0
    %810 = vmatprep.subr.mxu0 0.0
    %811 = vmatpush1.msra.mxu0 0.0
    %812 = vmatprep.subr.mxu0 0.0
    %813 = vmatpush1.msra.mxu0 0.0
    %814 = vmatprep.subr.mxu0 0.0
    %815 = vmatpush1.msra.mxu0 0.0
    %816 = vmatprep.subr.mxu0 0.0
    %817 = vmatpush1.msra.mxu0 0.0
    %818 = vmatprep.subr.mxu0 0.0
    %819 = vmatpush1.msra.mxu0 0.0
    %820 = vmatprep.subr.mxu0 0.0
    %821 = vmatpush1.msra.mxu0 0.0
    %822 = vmatprep.subr.mxu0 0.0
    %823 = vmatpush1.msra.mxu0 0.0
    %824 = vmatprep.subr.mxu0 0.0
    %825 = vmatpush1.msra.mxu0 0.0
    %826 = vmatprep.subr.mxu0 0.0
    %827 = vmatpush1.msra.mxu0 0.0
    %828 = vmatprep.subr.mxu0 0.0
    %829 = vmatpush1.msra.mxu0 0.0
    %830 = vmatprep.subr.mxu0 0.0
    %831 = vmatpush1.msra.mxu0 0.0
    %832 = vmatprep.subr.mxu0 0.0
    %833 = vmatpush1.msra.mxu0 0.0
    %834 = vmatprep.subr.mxu0 0.0
    %835 = vmatpush1.msra.mxu0 0.0
    %836 = vmatprep.subr.mxu0 0.0
    %837 = vmatpush1.msra.mxu0 0.0
    %838 = vmatprep.subr.mxu0 0.0
    %839 = vmatpush1.msra.mxu0 0.0
    %840 = vmatprep.mubr.f32.mxu0 0.0
    %841 = vmatmul.mubr.f32.gmra.mrb[0].mxu0 %v774
    %v842 = vpop.f32.mrb[0].mxu0
    %v843 = vadd.f32 0.0, %v842
    %v844 = vpop.f32.mrb[0].mxu0
    %845 = vdwg.mxu0
    %v846 = vadd.f32 %v770, %v843
    %v847 = vxor.u32 %v846, 2147483648
    %v848 = vmul.f32 %v847, 1.442695
    %v849 = vpow.pop %v848
    %v850 = vadd.f32 %v849, 1.0
    %v851 = vrcp.pop %v850
    %v852 = vmul.f32 1.0, %v851
    %v853 = vmul.f32 %v852, 2.0
    %v854 = vsub.f32 %v853, 1.0
    %v855 = vmul.f32 %v852, %v760
    %857 = vrot.lane.b32.xlu0 %v854, 64
    %v858 = vpop.permute.xlu0 %857
    %v860 = vmul.f32 %v852, %v858
    %862 = vrot.lane.b32.xlu0 %v860, 32
    %v863 = vpop.permute.xlu0 %862
    %v865 = vadd.f32 %v855, %v863
    %v866 = vtanh.pop %v865
    %868 = vrot.lane.b32.xlu0 %v866, 64
    %v869 = vpop.permute.xlu0 %868
    %v871 = vmul.f32 %v852, %v869
    %s872 = smul.u32 6, 2
    %s873 = smul.addr %s872, 8
    %s874 = scalar_lea.vmem [#allocation3], %s873
    %v875 = vld [vmem:[%s874] sm:$0xff]
    %877 = vrot.lane.b32.xlu0 %v871, 32
    %v878 = vpop.permute.xlu0 %877
    %v879 = vsel %vm247, %v878, 0
    %881 = vmatprep.subr.mxu0 0.0
    %882 = vmatpush1.msra.mxu0 %v230
    %883 = vmatprep.subr.mxu0 0.0
    %884 = vmatpush1.msra.mxu0 %v231
    %885 = vmatprep.subr.mxu0 0.0
    %886 = vmatpush1.msra.mxu0 %v232
    %887 = vmatprep.subr.mxu0 0.0
    %888 = vmatpush1.msra.mxu0 %v233
    %889 = vmatprep.subr.mxu0 0.0
    %890 = vmatpush1.msra.mxu0 0.0
    %891 = vmatprep.subr.mxu0 0.0
    %892 = vmatpush1.msra.mxu0 0.0
    %893 = vmatprep.subr.mxu0 0.0
    %894 = vmatpush1.msra.mxu0 0.0
    %895 = vmatprep.subr.mxu0 0.0
    %896 = vmatpush1.msra.mxu0 0.0
    %897 = vmatprep.subr.mxu0 0.0
    %898 = vmatpush1.msra.mxu0 0.0
    %899 = vmatprep.subr.mxu0 0.0
    %900 = vmatpush1.msra.mxu0 0.0
    %901 = vmatprep.subr.mxu0 0.0
    %902 = vmatpush1.msra.mxu0 0.0
    %903 = vmatprep.subr.mxu0 0.0
    %904 = vmatpush1.msra.mxu0 0.0
    %905 = vmatprep.subr.mxu0 0.0
    %906 = vmatpush1.msra.mxu0 0.0
    %907 = vmatprep.subr.mxu0 0.0
    %908 = vmatpush1.msra.mxu0 0.0
    %909 = vmatprep.subr.mxu0 0.0
    %910 = vmatpush1.msra.mxu0 0.0
    %911 = vmatprep.subr.mxu0 0.0
    %912 = vmatpush1.msra.mxu0 0.0
    %913 = vmatprep.subr.mxu0 0.0
    %914 = vmatpush1.msra.mxu0 0.0
    %915 = vmatprep.subr.mxu0 0.0
    %916 = vmatpush1.msra.mxu0 0.0
    %917 = vmatprep.subr.mxu0 0.0
    %918 = vmatpush1.msra.mxu0 0.0
    %919 = vmatprep.subr.mxu0 0.0
    %920 = vmatpush1.msra.mxu0 0.0
    %921 = vmatprep.subr.mxu0 0.0
    %922 = vmatpush1.msra.mxu0 0.0
    %923 = vmatprep.subr.mxu0 0.0
    %924 = vmatpush1.msra.mxu0 0.0
    %925 = vmatprep.subr.mxu0 0.0
    %926 = vmatpush1.msra.mxu0 0.0
    %927 = vmatprep.subr.mxu0 0.0
    %928 = vmatpush1.msra.mxu0 0.0
    %929 = vmatprep.subr.mxu0 0.0
    %930 = vmatpush1.msra.mxu0 0.0
    %931 = vmatprep.subr.mxu0 0.0
    %932 = vmatpush1.msra.mxu0 0.0
    %933 = vmatprep.subr.mxu0 0.0
    %934 = vmatpush1.msra.mxu0 0.0
    %935 = vmatprep.subr.mxu0 0.0
    %936 = vmatpush1.msra.mxu0 0.0
    %937 = vmatprep.subr.mxu0 0.0
    %938 = vmatpush1.msra.mxu0 0.0
    %939 = vmatprep.subr.mxu0 0.0
    %940 = vmatpush1.msra.mxu0 0.0
    %941 = vmatprep.subr.mxu0 0.0
    %942 = vmatpush1.msra.mxu0 0.0
    %943 = vmatprep.subr.mxu0 0.0
    %944 = vmatpush1.msra.mxu0 0.0
    %945 = vmatprep.mubr.f32.mxu0 0.0
    %946 = vmatmul.mubr.f32.gmra.mrb[0].mxu0 %v879
    %v947 = vpop.f32.mrb[0].mxu0
    %v948 = vadd.f32 0.0, %v947
    %v949 = vpop.f32.mrb[0].mxu0
    %950 = vdwg.mxu0
    %v951 = vadd.f32 %v875, %v948
    %v952 = vxor.u32 %v951, 2147483648
    %v953 = vmul.f32 %v952, 1.442695
    %v954 = vpow.pop %v953
    %v955 = vadd.f32 %v954, 1.0
    %v956 = vrcp.pop %v955
    %v957 = vmul.f32 1.0, %v956
    %v958 = vmul.f32 %v957, 2.0
    %v959 = vsub.f32 %v958, 1.0
    %v960 = vmul.f32 %v957, %v865
    %962 = vrot.lane.b32.xlu0 %v959, 64
    %v963 = vpop.permute.xlu0 %962
    %v965 = vmul.f32 %v957, %v963
    %967 = vrot.lane.b32.xlu0 %v965, 32
    %v968 = vpop.permute.xlu0 %967
    %v970 = vadd.f32 %v960, %v968
    %v971 = vtanh.pop %v970
    %973 = vrot.lane.b32.xlu0 %v971, 64
    %v974 = vpop.permute.xlu0 %973
    %v976 = vmul.f32 %v957, %v974
    %s977 = smul.u32 7, 2
    %s978 = smul.addr %s977, 8
    %s979 = scalar_lea.vmem [#allocation3], %s978
    %v980 = vld [vmem:[%s979] sm:$0xff]
    %982 = vrot.lane.b32.xlu0 %v976, 32
    %v983 = vpop.permute.xlu0 %982
    %v984 = vsel %vm247, %v983, 0
    %986 = vmatprep.subr.mxu0 0.0
    %987 = vmatpush1.msra.mxu0 %v230
    %988 = vmatprep.subr.mxu0 0.0
    %989 = vmatpush1.msra.mxu0 %v231
    %990 = vmatprep.subr.mxu0 0.0
    %991 = vmatpush1.msra.mxu0 %v232
    %992 = vmatprep.subr.mxu0 0.0
    %993 = vmatpush1.msra.mxu0 %v233
    %994 = vmatprep.subr.mxu0 0.0
    %995 = vmatpush1.msra.mxu0 0.0
    %996 = vmatprep.subr.mxu0 0.0
    %997 = vmatpush1.msra.mxu0 0.0
    %998 = vmatprep.subr.mxu0 0.0
    %999 = vmatpush1.msra.mxu0 0.0
    %1000 = vmatprep.subr.mxu0 0.0
    %1001 = vmatpush1.msra.mxu0 0.0
    %1002 = vmatprep.subr.mxu0 0.0
    %1003 = vmatpush1.msra.mxu0 0.0
    %1004 = vmatprep.subr.mxu0 0.0
    %1005 = vmatpush1.msra.mxu0 0.0
    %1006 = vmatprep.subr.mxu0 0.0
    %1007 = vmatpush1.msra.mxu0 0.0
    %1008 = vmatprep.subr.mxu0 0.0
    %1009 = vmatpush1.msra.mxu0 0.0
    %1010 = vmatprep.subr.mxu0 0.0
    %1011 = vmatpush1.msra.mxu0 0.0
    %1012 = vmatprep.subr.mxu0 0.0
    %1013 = vmatpush1.msra.mxu0 0.0
    %1014 = vmatprep.subr.mxu0 0.0
    %1015 = vmatpush1.msra.mxu0 0.0
    %1016 = vmatprep.subr.mxu0 0.0
    %1017 = vmatpush1.msra.mxu0 0.0
    %1018 = vmatprep.subr.mxu0 0.0
    %1019 = vmatpush1.msra.mxu0 0.0
    %1020 = vmatprep.subr.mxu0 0.0
    %1021 = vmatpush1.msra.mxu0 0.0
    %1022 = vmatprep.subr.mxu0 0.0
    %1023 = vmatpush1.msra.mxu0 0.0
    %1024 = vmatprep.subr.mxu0 0.0
    %1025 = vmatpush1.msra.mxu0 0.0
    %1026 = vmatprep.subr.mxu0 0.0
    %1027 = vmatpush1.msra.mxu0 0.0
    %1028 = vmatprep.subr.mxu0 0.0
    %1029 = vmatpush1.msra.mxu0 0.0
    %1030 = vmatprep.subr.mxu0 0.0
    %1031 = vmatpush1.msra.mxu0 0.0
    %1032 = vmatprep.subr.mxu0 0.0
    %1033 = vmatpush1.msra.mxu0 0.0
    %1034 = vmatprep.subr.mxu0 0.0
    %1035 = vmatpush1.msra.mxu0 0.0
    %1036 = vmatprep.subr.mxu0 0.0
    %1037 = vmatpush1.msra.mxu0 0.0
    %1038 = vmatprep.subr.mxu0 0.0
    %1039 = vmatpush1.msra.mxu0 0.0
    %1040 = vmatprep.subr.mxu0 0.0
    %1041 = vmatpush1.msra.mxu0 0.0
    %1042 = vmatprep.subr.mxu0 0.0
    %1043 = vmatpush1.msra.mxu0 0.0
    %1044 = vmatprep.subr.mxu0 0.0
    %1045 = vmatpush1.msra.mxu0 0.0
    %1046 = vmatprep.subr.mxu0 0.0
    %1047 = vmatpush1.msra.mxu0 0.0
    %1048 = vmatprep.subr.mxu0 0.0
    %1049 = vmatpush1.msra.mxu0 0.0
    %1050 = vmatprep.mubr.f32.mxu0 0.0
    %1051 = vmatmul.mubr.f32.gmra.mrb[0].mxu0 %v984
    %v1052 = vpop.f32.mrb[0].mxu0
    %v1053 = vadd.f32 0.0, %v1052
    %v1054 = vpop.f32.mrb[0].mxu0
    %1055 = vdwg.mxu0
    %v1056 = vadd.f32 %v980, %v1053
    %v1057 = vxor.u32 %v1056, 2147483648
    %v1058 = vmul.f32 %v1057, 1.442695
    %v1059 = vpow.pop %v1058
    %v1060 = vadd.f32 %v1059, 1.0
    %v1061 = vrcp.pop %v1060
    %v1062 = vmul.f32 1.0, %v1061
    %v1063 = vmul.f32 %v1062, 2.0
    %v1064 = vsub.f32 %v1063, 1.0
    %v1065 = vmul.f32 %v1062, %v970
    %1067 = vrot.lane.b32.xlu0 %v1064, 64
    %v1068 = vpop.permute.xlu0 %1067
    %v1070 = vmul.f32 %v1062, %v1068
    %1072 = vrot.lane.b32.xlu0 %v1070, 32
    %v1073 = vpop.permute.xlu0 %1072
    %v1075 = vadd.f32 %v1065, %v1073
    %v1076 = vtanh.pop %v1075
    %1078 = vrot.lane.b32.xlu0 %v1076, 64
    %v1079 = vpop.permute.xlu0 %1078
    %v1081 = vmul.f32 %v1062, %v1079
    %v1082 = vld [vmem:[#allocation3 + $0x78] sm:$0xff]
    %v1083 = vxor.u32 %v1082, 2147483648
    %v1084 = vmul.f32 %v1083, 1.442695
    %v1085 = vpow.pop %v1084
    %v1086 = vadd.f32 %v1085, 1.0
    %v1087 = vrcp.pop %v1086
    %v1088 = vmul.f32 1.0, %v1087
    %v1089 = vmul.f32 %v1088, 2.0
    %v1090 = vsub.f32 %v1089, 1.0
    %1092 = vrot.lane.b32.xlu0 %v1090, 64
    %v1093 = vpop.permute.xlu0 %1092
    %v1095 = vmul.f32 %v1088, %v1093
    %v1096 = vtanh.pop %v1095
    %1098 = vrot.lane.b32.xlu0 %v1096, 96
    %v1099 = vpop.permute.xlu0 %1098
    %v1101 = vmul.f32 %v1088, %v1099
    %1103 = vrot.lane.b32.xlu0 %v1101, 32
    %v1104 = vpop.permute.xlu0 %1103
    %v1105 = vsel %vm247, %v1104, 0
    %1107 = vmatprep.subr.mxu0 0.0
    %1108 = vmatpush1.msra.mxu0 %v238
    %1109 = vmatprep.subr.mxu0 0.0
    %1110 = vmatpush1.msra.mxu0 %v239
    %1111 = vmatprep.subr.mxu0 0.0
    %1112 = vmatpush1.msra.mxu0 %v240
    %1113 = vmatprep.subr.mxu0 0.0
    %1114 = vmatpush1.msra.mxu0 %v241
    %1115 = vmatprep.subr.mxu0 0.0
    %1116 = vmatpush1.msra.mxu0 0.0
    %1117 = vmatprep.subr.mxu0 0.0
    %1118 = vmatpush1.msra.mxu0 0.0
    %1119 = vmatprep.subr.mxu0 0.0
    %1120 = vmatpush1.msra.mxu0 0.0
    %1121 = vmatprep.subr.mxu0 0.0
    %1122 = vmatpush1.msra.mxu0 0.0
    %1123 = vmatprep.subr.mxu0 0.0
    %1124 = vmatpush1.msra.mxu0 0.0
    %1125 = vmatprep.subr.mxu0 0.0
    %1126 = vmatpush1.msra.mxu0 0.0
    %1127 = vmatprep.subr.mxu0 0.0
    %1128 = vmatpush1.msra.mxu0 0.0
    %1129 = vmatprep.subr.mxu0 0.0
    %1130 = vmatpush1.msra.mxu0 0.0
    %1131 = vmatprep.subr.mxu0 0.0
    %1132 = vmatpush1.msra.mxu0 0.0
    %1133 = vmatprep.subr.mxu0 0.0
    %1134 = vmatpush1.msra.mxu0 0.0
    %1135 = vmatprep.subr.mxu0 0.0
    %1136 = vmatpush1.msra.mxu0 0.0
    %1137 = vmatprep.subr.mxu0 0.0
    %1138 = vmatpush1.msra.mxu0 0.0
    %1139 = vmatprep.subr.mxu0 0.0
    %1140 = vmatpush1.msra.mxu0 0.0
    %1141 = vmatprep.subr.mxu0 0.0
    %1142 = vmatpush1.msra.mxu0 0.0
    %1143 = vmatprep.subr.mxu0 0.0
    %1144 = vmatpush1.msra.mxu0 0.0
    %1145 = vmatprep.subr.mxu0 0.0
    %1146 = vmatpush1.msra.mxu0 0.0
    %1147 = vmatprep.subr.mxu0 0.0
    %1148 = vmatpush1.msra.mxu0 0.0
    %1149 = vmatprep.subr.mxu0 0.0
    %1150 = vmatpush1.msra.mxu0 0.0
    %1151 = vmatprep.subr.mxu0 0.0
    %1152 = vmatpush1.msra.mxu0 0.0
    %1153 = vmatprep.subr.mxu0 0.0
    %1154 = vmatpush1.msra.mxu0 0.0
    %1155 = vmatprep.subr.mxu0 0.0
    %1156 = vmatpush1.msra.mxu0 0.0
    %1157 = vmatprep.subr.mxu0 0.0
    %1158 = vmatpush1.msra.mxu0 0.0
    %1159 = vmatprep.subr.mxu0 0.0
    %1160 = vmatpush1.msra.mxu0 0.0
    %1161 = vmatprep.subr.mxu0 0.0
    %1162 = vmatpush1.msra.mxu0 0.0
    %1163 = vmatprep.subr.mxu0 0.0
    %1164 = vmatpush1.msra.mxu0 0.0
    %1165 = vmatprep.subr.mxu0 0.0
    %1166 = vmatpush1.msra.mxu0 0.0
    %1167 = vmatprep.subr.mxu0 0.0
    %1168 = vmatpush1.msra.mxu0 0.0
    %1169 = vmatprep.subr.mxu0 0.0
    %1170 = vmatpush1.msra.mxu0 0.0
    %1171 = vmatprep.mubr.f32.mxu0 0.0
    %1172 = vmatmul.mubr.f32.gmra.mrb[0].mxu0 %v1105
    %v1173 = vpop.f32.mrb[0].mxu0
    %v1174 = vadd.f32 0.0, %v1173
    %v1175 = vpop.f32.mrb[0].mxu0
    %1176 = vdwg.mxu0
    %1178 = vrot.lane.b32.xlu0 %v1081, 32
    %v1179 = vpop.permute.xlu0 %1178
    %v1180 = vsel %vm247, %v1179, 0
    %1182 = vmatprep.subr.mxu0 0.0
    %1183 = vmatpush1.msra.mxu0 %v234
    %1184 = vmatprep.subr.mxu0 0.0
    %1185 = vmatpush1.msra.mxu0 %v235
    %1186 = vmatprep.subr.mxu0 0.0
    %1187 = vmatpush1.msra.mxu0 %v236
    %1188 = vmatprep.subr.mxu0 0.0
    %1189 = vmatpush1.msra.mxu0 %v237
    %1190 = vmatprep.subr.mxu0 0.0
    %1191 = vmatpush1.msra.mxu0 0.0
    %1192 = vmatprep.subr.mxu0 0.0
    %1193 = vmatpush1.msra.mxu0 0.0
    %1194 = vmatprep.subr.mxu0 0.0
    %1195 = vmatpush1.msra.mxu0 0.0
    %1196 = vmatprep.subr.mxu0 0.0
    %1197 = vmatpush1.msra.mxu0 0.0
    %1198 = vmatprep.subr.mxu0 0.0
    %1199 = vmatpush1.msra.mxu0 0.0
    %1200 = vmatprep.subr.mxu0 0.0
    %1201 = vmatpush1.msra.mxu0 0.0
    %1202 = vmatprep.subr.mxu0 0.0
    %1203 = vmatpush1.msra.mxu0 0.0
    %1204 = vmatprep.subr.mxu0 0.0
    %1205 = vmatpush1.msra.mxu0 0.0
    %1206 = vmatprep.subr.mxu0 0.0
    %1207 = vmatpush1.msra.mxu0 0.0
    %1208 = vmatprep.subr.mxu0 0.0
    %1209 = vmatpush1.msra.mxu0 0.0
    %1210 = vmatprep.subr.mxu0 0.0
    %1211 = vmatpush1.msra.mxu0 0.0
    %1212 = vmatprep.subr.mxu0 0.0
    %1213 = vmatpush1.msra.mxu0 0.0
    %1214 = vmatprep.subr.mxu0 0.0
    %1215 = vmatpush1.msra.mxu0 0.0
    %1216 = vmatprep.subr.mxu0 0.0
    %1217 = vmatpush1.msra.mxu0 0.0
    %1218 = vmatprep.subr.mxu0 0.0
    %1219 = vmatpush1.msra.mxu0 0.0
    %1220 = vmatprep.subr.mxu0 0.0
    %1221 = vmatpush1.msra.mxu0 0.0
    %1222 = vmatprep.subr.mxu0 0.0
    %1223 = vmatpush1.msra.mxu0 0.0
    %1224 = vmatprep.subr.mxu0 0.0
    %1225 = vmatpush1.msra.mxu0 0.0
    %1226 = vmatprep.subr.mxu0 0.0
    %1227 = vmatpush1.msra.mxu0 0.0
    %1228 = vmatprep.subr.mxu0 0.0
    %1229 = vmatpush1.msra.mxu0 0.0
    %1230 = vmatprep.subr.mxu0 0.0
    %1231 = vmatpush1.msra.mxu0 0.0
    %1232 = vmatprep.subr.mxu0 0.0
    %1233 = vmatpush1.msra.mxu0 0.0
    %1234 = vmatprep.subr.mxu0 0.0
    %1235 = vmatpush1.msra.mxu0 0.0
    %1236 = vmatprep.subr.mxu0 0.0
    %1237 = vmatpush1.msra.mxu0 0.0
    %1238 = vmatprep.subr.mxu0 0.0
    %1239 = vmatpush1.msra.mxu0 0.0
    %1240 = vmatprep.subr.mxu0 0.0
    %1241 = vmatpush1.msra.mxu0 0.0
    %1242 = vmatprep.subr.mxu0 0.0
    %1243 = vmatpush1.msra.mxu0 0.0
    %1244 = vmatprep.subr.mxu0 0.0
    %1245 = vmatpush1.msra.mxu0 0.0
    %1246 = vmatprep.mubr.f32.mxu0 0.0
    %1247 = vmatmul.mubr.f32.gmra.mrb[0].mxu0 %v1180
    %v1248 = vpop.f32.mrb[0].mxu0
    %v1249 = vadd.f32 %v1174, %v1248
    %v1250 = vpop.f32.mrb[0].mxu0
    %1251 = vdwg.mxu0
    %v1252 = vadd.f32 %v1249, %v242
    %1253 = vst [vmem:[%s3] sm:$0xff] %v1252
    // Predicated region
    $region25: #{blstm_forward.1} parent=1 // pred_check
      _
    $region26: #{blstm_forward.1} parent=1 // pred_check_branch
      %1255 = sbr.rel (0) target = $region28
    $region27: #{blstm_forward.1} parent=1 // pred_region
      _
    $region28: #{blstm_forward.1} parent=1 // pred_fallthru
      _
    // Predicated region
    $region29: #{blstm_forward.1} parent=1 // pred_check
      _
    $region30: #{blstm_forward.1} parent=1 // pred_check_branch
      %1257 = sbr.rel (0) target = $region32
    $region31: #{blstm_forward.1} parent=1 // pred_region
      _
    $region32: #{blstm_forward.1} parent=1 // pred_fallthru
      _
    %1258 = vsyncpa [#allocation5], 1

</llo_original>
